<compile_context>
chip_gen: v6e
topology: v6e:2x2x1
jax: 0.10.0
libtpu: 0.0.40
codegen_flags: <defaults>
</compile_context>

<pallas_src>
import math
import functools

import jax
import jax.numpy as jnp
from jax.experimental import pallas as pl
from jax.experimental.pallas import tpu as pltpu


# ------------------------------- fused kernel --------------------------------

def _layernorm(x, w, b, eps=1e-5):
    mu = jnp.mean(x, axis=-1, keepdims=True)
    var = jnp.mean((x - mu) ** 2, axis=-1, keepdims=True)   # biased, like torch
    return (x - mu) * jax.lax.rsqrt(var + eps) * w + b


def fused_transformer_kernel(x_ref, wqkv_ref, wo_ref, w1_ref, w2_ref, linw_ref,
                             c_ref, out_ref, *, nhead, num_layers):
    """PositionalEncoding + `num_layers` post-norm encoder layers + final linear,
    fully VMEM-resident on a single (S, H) activation tile (single grid step)."""
    S, H = x_ref.shape
    dh = H // nhead
    FF = w1_ref.shape[-1]
    d_model = out_ref.shape[-1]

    c = c_ref[...]                                    # (8L+2, CW) f32 — one load

    # PositionalEncoding quirk at B=1: only pe row 0 is broadcast over all tokens.
    pe = c[8 * num_layers:8 * num_layers + 1, :H]     # (1, H)
    x = x_ref[...] + pe                               # (S, H) f32 residual stream

    for l in range(num_layers):
        b = 8 * l
        b_qkv = c[b + 0:b + 1, :3 * H]                # (1, 3H); q-scale folded in
        bo    = c[b + 1:b + 2, :H]
        ln1w  = c[b + 2:b + 3, :H]
        ln1b  = c[b + 3:b + 4, :H]
        b1    = c[b + 4:b + 5, :FF]
        b2    = c[b + 5:b + 6, :H]
        ln2w  = c[b + 6:b + 7, :H]
        ln2b  = c[b + 7:b + 8, :H]

        # ---- fused QKV projection: ONE 96-lane-wide bf16 MXU matmul ----
        qkv = jnp.dot(x.astype(jnp.bfloat16), wqkv_ref[l],
                      preferred_element_type=jnp.float32) + b_qkv     # (S, 3H) f32

        # ---- per-head attention (scores / softmax / context), f32 ----
        ctx_cols = []
        for h in range(nhead):
            qh = qkv[:, h * dh:(h + 1) * dh]                          # (S, dh)
            kh = qkv[:, H + h * dh:H + (h + 1) * dh]
            vh = qkv[:, 2 * H + h * dh:2 * H + (h + 1) * dh]
            s = jax.lax.dot_general(qh, kh, (((1,), (1,)), ((), ())),
                                    preferred_element_type=jnp.float32)  # (S, S)
            s = s - jnp.max(s, axis=-1, keepdims=True)   # kept for torch parity
            p = jnp.exp(s)
            p = p * pl.reciprocal(jnp.sum(p, axis=-1, keepdims=True), approx=True)
            ctx_cols.append(jnp.dot(p, vh, preferred_element_type=jnp.float32))
        ctx = jnp.concatenate(ctx_cols, axis=-1)                      # (S, H)

        # ---- head-summed output projection: ONE (S,H)@(H,H) matmul ----
        attn = jnp.dot(ctx.astype(jnp.bfloat16), wo_ref[l],
                       preferred_element_type=jnp.float32) + bo

        # ---- residual + norm1 (post-norm) ----
        x1 = _layernorm(x + attn, ln1w, ln1b)

        # ---- feed-forward: relu(x W1 + b1) W2 + b2 ----
        ff = jnp.dot(x1.astype(jnp.bfloat16), w1_ref[l],
                     preferred_element_type=jnp.float32) + b1
        ff = jnp.maximum(ff, 0.0)
        ff = jnp.dot(ff.astype(jnp.bfloat16), w2_ref[l],
                     preferred_element_type=jnp.float32) + b2

        # ---- residual + norm2 ----
        x = _layernorm(x1 + ff, ln2w, ln2b)

    # ---- final linear ----
    lin_b = c[8 * num_layers + 1:8 * num_layers + 2, :d_model]
    out_ref[...] = jnp.dot(x.astype(jnp.bfloat16), linw_ref[...],
                           preferred_element_type=jnp.float32) + lin_b


# ----------------------------- parameter setup --------------------------------

def make_positional_encoding(max_len, dim):
    position = jnp.arange(max_len, dtype=jnp.float32)[:, None]
    div_term = jnp.exp(jnp.arange(0, dim, 2, dtype=jnp.float32)
                       * (-math.log(10000.0) / dim))
    pe = jnp.zeros((max_len, dim), jnp.float32)
    pe = pe.at[:, 0::2].set(jnp.sin(position * div_term))
    pe = pe.at[:, 1::2].set(jnp.cos(position * div_term))
    return pe


def init_params(key, nhead, d_model, hid_size, layers_trans, max_len):
    """torch-layout parameters (random init, same layout as nn.TransformerEncoderLayer)."""
    H, FF = hid_size, 4 * hid_size
    keys = iter(jax.random.split(key, layers_trans * 6 + 2))
    params = {'pe': make_positional_encoding(max_len, H), 'layers': []}
    for _ in range(layers_trans):
        params['layers'].append(dict(
            wqkv=0.05 * jax.random.normal(next(keys), (3 * H, H), jnp.float32),
            bqkv=0.01 * jax.random.normal(next(keys), (3 * H,), jnp.float32),
            wo=0.05 * jax.random.normal(next(keys), (H, H), jnp.float32),
            bo=jnp.zeros((H,), jnp.float32),
            ln1w=jnp.ones((H,), jnp.float32),
            ln1b=jnp.zeros((H,), jnp.float32),
            w1=0.05 * jax.random.normal(next(keys), (FF, H), jnp.float32),
            b1=0.01 * jax.random.normal(next(keys), (FF,), jnp.float32),
            w2=0.05 * jax.random.normal(next(keys), (H, FF), jnp.float32),
            b2=jnp.zeros((H,), jnp.float32),
            ln2w=jnp.ones((H,), jnp.float32),
            ln2b=jnp.zeros((H,), jnp.float32),
        ))
    params['lin_w'] = 0.05 * jax.random.normal(next(keys), (d_model, H), jnp.float32)
    params['lin_b'] = 0.01 * jax.random.normal(next(keys), (d_model,), jnp.float32)
    return params


def prepare_params(params, nhead):
    """One-time re-layout into kernel form:
       * Wqkv/Wo/W1/W2 pre-transposed, stacked over layers, stored bf16,
         with the 1/sqrt(dh) attention scale folded into the Q columns/bias.
       * every bias / LN param / PE row / final bias packed into ONE
         lane-aligned (8*L + 2, CW) f32 slab (CW = max(128, 3H, 4H))."""
    d_model, H = params['lin_w'].shape
    FF = 4 * H
    dh = H // nhead
    scale = 1.0 / math.sqrt(dh)
    CW = max(128, 3 * H, FF)

    def crow(v):
        v = jnp.asarray(v, jnp.float32).reshape(-1)
        return jnp.pad(v, (0, CW - v.shape[0]))

    # scale Q columns of the fused (H, 3H) weight and the first H bias entries
    qkv_col_scale = jnp.concatenate([jnp.full((H,), scale, jnp.float32),
                                     jnp.ones((2 * H,), jnp.float32)])

    wqkv_l, wo_l, w1_l, w2_l, crows = [], [], [], [], []
    for lp in params['layers']:
        wqkv_l.append((lp['wqkv'].T * qkv_col_scale[None, :]).astype(jnp.bfloat16))
        wo_l.append(lp['wo'].T.astype(jnp.bfloat16))
        w1_l.append(lp['w1'].T.astype(jnp.bfloat16))
        w2_l.append(lp['w2'].T.astype(jnp.bfloat16))
        crows += [crow(lp['bqkv'] * qkv_col_scale),
                  crow(lp['bo']),
                  crow(lp['ln1w']), crow(lp['ln1b']),
                  crow(lp['b1']), crow(lp['b2']),
                  crow(lp['ln2w']), crow(lp['ln2b'])]
    crows += [crow(params['pe'][0]),        # pe row 0 (module quirk at B=1)
              crow(params['lin_b'])]

    return {
        'wqkv':   jnp.stack(wqkv_l),                            # (L, H, 3H) bf16
        'wo':     jnp.stack(wo_l),                              # (L, H, H)  bf16
        'w1':     jnp.stack(w1_l),                              # (L, H, FF) bf16
        'w2':     jnp.stack(w2_l),                              # (L, FF, H) bf16
        'lin_w':  params['lin_w'].T.astype(jnp.bfloat16),       # (H, d_model) bf16
        'consts': jnp.stack(crows),                             # (8L+2, CW) f32
    }


# ------------------------------ forward pass ----------------------------------

def transformer_block_forward(word_vectors, prepared, *, nhead, num_layers):
    # word_vectors: (B, S, H); B must be 1 (reference module's squeeze(0) / pe[:B]).
    B, S, H = word_vectors.shape
    assert B == 1, "reference TransformerBlock semantics require batch size 1"
    x = word_vectors[0]                                  # (S, H)
    d_model = prepared['lin_w'].shape[1]

    kernel = functools.partial(fused_transformer_kernel,
                               nhead=nhead, num_layers=num_layers)
    vspec = pl.BlockSpec(memory_space=pltpu.MemorySpace.VMEM)
    # Gridless single step; entire problem (<64 KiB of operands) lives in VMEM.
    out = pl.pallas_call(
        kernel,
        out_shape=jax.ShapeDtypeStruct((S, d_model), jnp.float32),
        in_specs=[vspec] * 7,
        out_specs=vspec,
    )(x, prepared['wqkv'], prepared['wo'], prepared['w1'], prepared['w2'],
      prepared['lin_w'], prepared['consts'])
    return out                                           # == torch out.squeeze(0)


# ---------------------------------- main ---------------------------------------

if __name__ == "__main__":
    # module hyperparams
    nhead, dropout, d_model, hid_size, layers_trans, max_len = 4, 0.0, 16, 32, 2, 64
    B, S = 1, 8   # B=1 so the reference module's squeeze(0)/pe-broadcast are valid

    key = jax.random.PRNGKey(0)
    kx, kp = jax.random.split(key)
    word_vectors = jax.random.normal(kx, (B, S, hid_size), jnp.float32)

    params = init_params(kp, nhead, d_model, hid_size, layers_trans, max_len)
    prepared = prepare_params(params, nhead)             # one-time weight re-layout

    fwd = jax.jit(functools.partial(transformer_block_forward,
                                    nhead=nhead, num_layers=layers_trans))
    out = jax.block_until_ready(fwd(word_vectors, prepared))

    assert out.shape == (S, d_model), out.shape
    assert bool(jnp.all(jnp.isfinite(out)))
    print("KERNEL_OK")
</pallas_src>

<mosaic_0001>
module attributes {stable_mosaic.version = 11 : i64} {
  func.func @fused_transformer_kernel(%arg0: memref<8x32xf32, #tpu.memory_space<vmem>>, %arg1: memref<2x32x96xbf16, #tpu.memory_space<vmem>>, %arg2: memref<2x32x32xbf16, #tpu.memory_space<vmem>>, %arg3: memref<2x32x128xbf16, #tpu.memory_space<vmem>>, %arg4: memref<2x128x32xbf16, #tpu.memory_space<vmem>>, %arg5: memref<32x16xbf16, #tpu.memory_space<vmem>>, %arg6: memref<18x128xf32, #tpu.memory_space<vmem>>, %arg7: memref<8x16xf32, #tpu.memory_space<vmem>>) attributes {dimension_semantics = [], scalar_prefetch = 0 : i64, scratch_operands = 0 : i64, tpu.core_type = #tpu.core_type<tc>} {
    %c0 = arith.constant 0 : index
    %c0_0 = arith.constant 0 : index
    %0 = vector.load %arg6[%c0, %c0_0] : memref<18x128xf32, #tpu.memory_space<vmem>>, vector<18x128xf32>
    %1 = vector.extract_strided_slice %0 {offsets = [16, 0], sizes = [1, 32], strides = [1, 1]} : vector<18x128xf32> to vector<1x32xf32>
    %c0_1 = arith.constant 0 : index
    %c0_2 = arith.constant 0 : index
    %2 = vector.load %arg0[%c0_1, %c0_2] : memref<8x32xf32, #tpu.memory_space<vmem>>, vector<8x32xf32>
    %3 = vector.broadcast %1 : vector<1x32xf32> to vector<8x32xf32>
    %4 = arith.addf %2, %3 : vector<8x32xf32>
    %5 = vector.extract_strided_slice %0 {offsets = [0, 0], sizes = [1, 96], strides = [1, 1]} : vector<18x128xf32> to vector<1x96xf32>
    %6 = vector.extract_strided_slice %0 {offsets = [1, 0], sizes = [1, 32], strides = [1, 1]} : vector<18x128xf32> to vector<1x32xf32>
    %7 = vector.extract_strided_slice %0 {offsets = [2, 0], sizes = [1, 32], strides = [1, 1]} : vector<18x128xf32> to vector<1x32xf32>
    %8 = vector.extract_strided_slice %0 {offsets = [3, 0], sizes = [1, 32], strides = [1, 1]} : vector<18x128xf32> to vector<1x32xf32>
    %9 = vector.extract_strided_slice %0 {offsets = [4, 0], sizes = [1, 128], strides = [1, 1]} : vector<18x128xf32> to vector<1x128xf32>
    %10 = vector.extract_strided_slice %0 {offsets = [5, 0], sizes = [1, 32], strides = [1, 1]} : vector<18x128xf32> to vector<1x32xf32>
    %11 = vector.extract_strided_slice %0 {offsets = [6, 0], sizes = [1, 32], strides = [1, 1]} : vector<18x128xf32> to vector<1x32xf32>
    %12 = vector.extract_strided_slice %0 {offsets = [7, 0], sizes = [1, 32], strides = [1, 1]} : vector<18x128xf32> to vector<1x32xf32>
    %13 = arith.truncf %4 : vector<8x32xf32> to vector<8x32xbf16>
    %c0_3 = arith.constant 0 : index
    %c0_4 = arith.constant 0 : index
    %c0_5 = arith.constant 0 : index
    %14 = vector.load %arg1[%c0_3, %c0_4, %c0_5] : memref<2x32x96xbf16, #tpu.memory_space<vmem>>, vector<1x32x96xbf16>
    %15 = vector.shape_cast %14 : vector<1x32x96xbf16> to vector<32x96xbf16>
    %cst = arith.constant dense<0.000000e+00> : vector<8x96xf32>
    %16 = tpu.matmul %13, %15, %cst {dimension_numbers = #tpu.dot_dimension_numbers<[1], [0], [0], [1], [0, 0, 1, 1], [], []>} : vector<8x32xbf16>, vector<32x96xbf16>, vector<8x96xf32> -> vector<8x96xf32>
    %17 = vector.broadcast %5 : vector<1x96xf32> to vector<8x96xf32>
    %18 = arith.addf %16, %17 : vector<8x96xf32>
    %19 = vector.extract_strided_slice %18 {offsets = [0, 0], sizes = [8, 8], strides = [1, 1]} : vector<8x96xf32> to vector<8x8xf32>
    %20 = vector.extract_strided_slice %18 {offsets = [0, 32], sizes = [8, 8], strides = [1, 1]} : vector<8x96xf32> to vector<8x8xf32>
    %21 = vector.extract_strided_slice %18 {offsets = [0, 64], sizes = [8, 8], strides = [1, 1]} : vector<8x96xf32> to vector<8x8xf32>
    %cst_6 = arith.constant dense<0.000000e+00> : vector<8x8xf32>
    %22 = tpu.matmul %19, %20, %cst_6 {dimension_numbers = #tpu.dot_dimension_numbers<[1], [1], [0], [0], [0, 0, 1, 0], [], []>} : vector<8x8xf32>, vector<8x8xf32>, vector<8x8xf32> -> vector<8x8xf32>
    %cst_7 = arith.constant dense<0xFF800000> : vector<8xf32>
    %23 = vector.multi_reduction <maximumf>, %22, %cst_7 [1] : vector<8x8xf32> to vector<8xf32>
    %24 = vector.shape_cast %23 : vector<8xf32> to vector<8x1xf32>
    %25 = vector.broadcast %24 : vector<8x1xf32> to vector<8x8xf32>
    %26 = arith.subf %22, %25 : vector<8x8xf32>
    %27 = math.exp %26 : vector<8x8xf32>
    %cst_8 = arith.constant dense<0.000000e+00> : vector<8xf32>
    %28 = vector.multi_reduction <add>, %27, %cst_8 [1] : vector<8x8xf32> to vector<8xf32>
    %29 = vector.shape_cast %28 : vector<8xf32> to vector<8x1xf32>
    %30 = tpu.reciprocal %29 {approx = true} : vector<8x1xf32> -> vector<8x1xf32>
    %31 = vector.broadcast %30 : vector<8x1xf32> to vector<8x8xf32>
    %32 = arith.mulf %27, %31 : vector<8x8xf32>
    %cst_9 = arith.constant dense<0.000000e+00> : vector<8x8xf32>
    %33 = tpu.matmul %32, %21, %cst_9 {dimension_numbers = #tpu.dot_dimension_numbers<[1], [0], [0], [1], [0, 0, 1, 1], [], []>} : vector<8x8xf32>, vector<8x8xf32>, vector<8x8xf32> -> vector<8x8xf32>
    %34 = vector.extract_strided_slice %18 {offsets = [0, 8], sizes = [8, 8], strides = [1, 1]} : vector<8x96xf32> to vector<8x8xf32>
    %35 = vector.extract_strided_slice %18 {offsets = [0, 40], sizes = [8, 8], strides = [1, 1]} : vector<8x96xf32> to vector<8x8xf32>
    %36 = vector.extract_strided_slice %18 {offsets = [0, 72], sizes = [8, 8], strides = [1, 1]} : vector<8x96xf32> to vector<8x8xf32>
    %cst_10 = arith.constant dense<0.000000e+00> : vector<8x8xf32>
    %37 = tpu.matmul %34, %35, %cst_10 {dimension_numbers = #tpu.dot_dimension_numbers<[1], [1], [0], [0], [0, 0, 1, 0], [], []>} : vector<8x8xf32>, vector<8x8xf32>, vector<8x8xf32> -> vector<8x8xf32>
    %cst_11 = arith.constant dense<0xFF800000> : vector<8xf32>
    %38 = vector.multi_reduction <maximumf>, %37, %cst_11 [1] : vector<8x8xf32> to vector<8xf32>
    %39 = vector.shape_cast %38 : vector<8xf32> to vector<8x1xf32>
    %40 = vector.broadcast %39 : vector<8x1xf32> to vector<8x8xf32>
    %41 = arith.subf %37, %40 : vector<8x8xf32>
    %42 = math.exp %41 : vector<8x8xf32>
    %cst_12 = arith.constant dense<0.000000e+00> : vector<8xf32>
    %43 = vector.multi_reduction <add>, %42, %cst_12 [1] : vector<8x8xf32> to vector<8xf32>
    %44 = vector.shape_cast %43 : vector<8xf32> to vector<8x1xf32>
    %45 = tpu.reciprocal %44 {approx = true} : vector<8x1xf32> -> vector<8x1xf32>
    %46 = vector.broadcast %45 : vector<8x1xf32> to vector<8x8xf32>
    %47 = arith.mulf %42, %46 : vector<8x8xf32>
    %cst_13 = arith.constant dense<0.000000e+00> : vector<8x8xf32>
    %48 = tpu.matmul %47, %36, %cst_13 {dimension_numbers = #tpu.dot_dimension_numbers<[1], [0], [0], [1], [0, 0, 1, 1], [], []>} : vector<8x8xf32>, vector<8x8xf32>, vector<8x8xf32> -> vector<8x8xf32>
    %49 = vector.extract_strided_slice %18 {offsets = [0, 16], sizes = [8, 8], strides = [1, 1]} : vector<8x96xf32> to vector<8x8xf32>
    %50 = vector.extract_strided_slice %18 {offsets = [0, 48], sizes = [8, 8], strides = [1, 1]} : vector<8x96xf32> to vector<8x8xf32>
    %51 = vector.extract_strided_slice %18 {offsets = [0, 80], sizes = [8, 8], strides = [1, 1]} : vector<8x96xf32> to vector<8x8xf32>
    %cst_14 = arith.constant dense<0.000000e+00> : vector<8x8xf32>
    %52 = tpu.matmul %49, %50, %cst_14 {dimension_numbers = #tpu.dot_dimension_numbers<[1], [1], [0], [0], [0, 0, 1, 0], [], []>} : vector<8x8xf32>, vector<8x8xf32>, vector<8x8xf32> -> vector<8x8xf32>
    %cst_15 = arith.constant dense<0xFF800000> : vector<8xf32>
    %53 = vector.multi_reduction <maximumf>, %52, %cst_15 [1] : vector<8x8xf32> to vector<8xf32>
    %54 = vector.shape_cast %53 : vector<8xf32> to vector<8x1xf32>
    %55 = vector.broadcast %54 : vector<8x1xf32> to vector<8x8xf32>
    %56 = arith.subf %52, %55 : vector<8x8xf32>
    %57 = math.exp %56 : vector<8x8xf32>
    %cst_16 = arith.constant dense<0.000000e+00> : vector<8xf32>
    %58 = vector.multi_reduction <add>, %57, %cst_16 [1] : vector<8x8xf32> to vector<8xf32>
    %59 = vector.shape_cast %58 : vector<8xf32> to vector<8x1xf32>
    %60 = tpu.reciprocal %59 {approx = true} : vector<8x1xf32> -> vector<8x1xf32>
    %61 = vector.broadcast %60 : vector<8x1xf32> to vector<8x8xf32>
    %62 = arith.mulf %57, %61 : vector<8x8xf32>
    %cst_17 = arith.constant dense<0.000000e+00> : vector<8x8xf32>
    %63 = tpu.matmul %62, %51, %cst_17 {dimension_numbers = #tpu.dot_dimension_numbers<[1], [0], [0], [1], [0, 0, 1, 1], [], []>} : vector<8x8xf32>, vector<8x8xf32>, vector<8x8xf32> -> vector<8x8xf32>
    %64 = vector.extract_strided_slice %18 {offsets = [0, 24], sizes = [8, 8], strides = [1, 1]} : vector<8x96xf32> to vector<8x8xf32>
    %65 = vector.extract_strided_slice %18 {offsets = [0, 56], sizes = [8, 8], strides = [1, 1]} : vector<8x96xf32> to vector<8x8xf32>
    %66 = vector.extract_strided_slice %18 {offsets = [0, 88], sizes = [8, 8], strides = [1, 1]} : vector<8x96xf32> to vector<8x8xf32>
    %cst_18 = arith.constant dense<0.000000e+00> : vector<8x8xf32>
    %67 = tpu.matmul %64, %65, %cst_18 {dimension_numbers = #tpu.dot_dimension_numbers<[1], [1], [0], [0], [0, 0, 1, 0], [], []>} : vector<8x8xf32>, vector<8x8xf32>, vector<8x8xf32> -> vector<8x8xf32>
    %cst_19 = arith.constant dense<0xFF800000> : vector<8xf32>
    %68 = vector.multi_reduction <maximumf>, %67, %cst_19 [1] : vector<8x8xf32> to vector<8xf32>
    %69 = vector.shape_cast %68 : vector<8xf32> to vector<8x1xf32>
    %70 = vector.broadcast %69 : vector<8x1xf32> to vector<8x8xf32>
    %71 = arith.subf %67, %70 : vector<8x8xf32>
    %72 = math.exp %71 : vector<8x8xf32>
    %cst_20 = arith.constant dense<0.000000e+00> : vector<8xf32>
    %73 = vector.multi_reduction <add>, %72, %cst_20 [1] : vector<8x8xf32> to vector<8xf32>
    %74 = vector.shape_cast %73 : vector<8xf32> to vector<8x1xf32>
    %75 = tpu.reciprocal %74 {approx = true} : vector<8x1xf32> -> vector<8x1xf32>
    %76 = vector.broadcast %75 : vector<8x1xf32> to vector<8x8xf32>
    %77 = arith.mulf %72, %76 : vector<8x8xf32>
    %cst_21 = arith.constant dense<0.000000e+00> : vector<8x8xf32>
    %78 = tpu.matmul %77, %66, %cst_21 {dimension_numbers = #tpu.dot_dimension_numbers<[1], [0], [0], [1], [0, 0, 1, 1], [], []>} : vector<8x8xf32>, vector<8x8xf32>, vector<8x8xf32> -> vector<8x8xf32>
    %79 = tpu.concatenate %33, %48, %63, %78 in 1 : vector<8x8xf32>, vector<8x8xf32>, vector<8x8xf32>, vector<8x8xf32> -> vector<8x32xf32>
    %80 = arith.truncf %79 : vector<8x32xf32> to vector<8x32xbf16>
    %c0_22 = arith.constant 0 : index
    %c0_23 = arith.constant 0 : index
    %c0_24 = arith.constant 0 : index
    %81 = vector.load %arg2[%c0_22, %c0_23, %c0_24] : memref<2x32x32xbf16, #tpu.memory_space<vmem>>, vector<1x32x32xbf16>
    %82 = vector.shape_cast %81 : vector<1x32x32xbf16> to vector<32x32xbf16>
    %cst_25 = arith.constant dense<0.000000e+00> : vector<8x32xf32>
    %83 = tpu.matmul %80, %82, %cst_25 {dimension_numbers = #tpu.dot_dimension_numbers<[1], [0], [0], [1], [0, 0, 1, 1], [], []>} : vector<8x32xbf16>, vector<32x32xbf16>, vector<8x32xf32> -> vector<8x32xf32>
    %84 = vector.broadcast %6 : vector<1x32xf32> to vector<8x32xf32>
    %85 = arith.addf %83, %84 : vector<8x32xf32>
    %86 = arith.addf %4, %85 : vector<8x32xf32>
    %cst_26 = arith.constant dense<0.000000e+00> : vector<8xf32>
    %87 = vector.multi_reduction <add>, %86, %cst_26 [1] : vector<8x32xf32> to vector<8xf32>
    %88 = vector.shape_cast %87 : vector<8xf32> to vector<8x1xf32>
    %cst_27 = arith.constant 3.200000e+01 : f32
    %89 = vector.broadcast %cst_27 : f32 to vector<8x1xf32>
    %90 = arith.divf %88, %89 : vector<8x1xf32>
    %91 = vector.broadcast %90 : vector<8x1xf32> to vector<8x32xf32>
    %92 = arith.subf %86, %91 : vector<8x32xf32>
    %93 = arith.mulf %92, %92 : vector<8x32xf32>
    %cst_28 = arith.constant dense<0.000000e+00> : vector<8xf32>
    %94 = vector.multi_reduction <add>, %93, %cst_28 [1] : vector<8x32xf32> to vector<8xf32>
    %95 = vector.shape_cast %94 : vector<8xf32> to vector<8x1xf32>
    %cst_29 = arith.constant 3.200000e+01 : f32
    %96 = vector.broadcast %cst_29 : f32 to vector<8x1xf32>
    %97 = arith.divf %95, %96 : vector<8x1xf32>
    %98 = vector.broadcast %90 : vector<8x1xf32> to vector<8x32xf32>
    %99 = arith.subf %86, %98 : vector<8x32xf32>
    %cst_30 = arith.constant 9.99999974E-6 : f32
    %100 = vector.broadcast %cst_30 : f32 to vector<8x1xf32>
    %101 = arith.addf %97, %100 : vector<8x1xf32>
    %102 = math.rsqrt %101 : vector<8x1xf32>
    %103 = vector.broadcast %102 : vector<8x1xf32> to vector<8x32xf32>
    %104 = arith.mulf %99, %103 : vector<8x32xf32>
    %105 = vector.broadcast %7 : vector<1x32xf32> to vector<8x32xf32>
    %106 = arith.mulf %104, %105 : vector<8x32xf32>
    %107 = vector.broadcast %8 : vector<1x32xf32> to vector<8x32xf32>
    %108 = arith.addf %106, %107 : vector<8x32xf32>
    %109 = arith.truncf %108 : vector<8x32xf32> to vector<8x32xbf16>
    %c0_31 = arith.constant 0 : index
    %c0_32 = arith.constant 0 : index
    %c0_33 = arith.constant 0 : index
    %110 = vector.load %arg3[%c0_31, %c0_32, %c0_33] : memref<2x32x128xbf16, #tpu.memory_space<vmem>>, vector<1x32x128xbf16>
    %111 = vector.shape_cast %110 : vector<1x32x128xbf16> to vector<32x128xbf16>
    %cst_34 = arith.constant dense<0.000000e+00> : vector<8x128xf32>
    %112 = tpu.matmul %109, %111, %cst_34 {dimension_numbers = #tpu.dot_dimension_numbers<[1], [0], [0], [1], [0, 0, 1, 1], [], []>} : vector<8x32xbf16>, vector<32x128xbf16>, vector<8x128xf32> -> vector<8x128xf32>
    %113 = vector.broadcast %9 : vector<1x128xf32> to vector<8x128xf32>
    %114 = arith.addf %112, %113 : vector<8x128xf32>
    %cst_35 = arith.constant 0.000000e+00 : f32
    %115 = vector.broadcast %cst_35 : f32 to vector<8x128xf32>
    %116 = arith.maximumf %114, %115 : vector<8x128xf32>
    %117 = arith.truncf %116 : vector<8x128xf32> to vector<8x128xbf16>
    %c0_36 = arith.constant 0 : index
    %c0_37 = arith.constant 0 : index
    %c0_38 = arith.constant 0 : index
    %118 = vector.load %arg4[%c0_36, %c0_37, %c0_38] : memref<2x128x32xbf16, #tpu.memory_space<vmem>>, vector<1x128x32xbf16>
    %119 = vector.shape_cast %118 : vector<1x128x32xbf16> to vector<128x32xbf16>
    %cst_39 = arith.constant dense<0.000000e+00> : vector<8x32xf32>
    %120 = tpu.matmul %117, %119, %cst_39 {dimension_numbers = #tpu.dot_dimension_numbers<[1], [0], [0], [1], [0, 0, 1, 1], [], []>} : vector<8x128xbf16>, vector<128x32xbf16>, vector<8x32xf32> -> vector<8x32xf32>
    %121 = vector.broadcast %10 : vector<1x32xf32> to vector<8x32xf32>
    %122 = arith.addf %120, %121 : vector<8x32xf32>
    %123 = arith.addf %108, %122 : vector<8x32xf32>
    %cst_40 = arith.constant dense<0.000000e+00> : vector<8xf32>
    %124 = vector.multi_reduction <add>, %123, %cst_40 [1] : vector<8x32xf32> to vector<8xf32>
    %125 = vector.shape_cast %124 : vector<8xf32> to vector<8x1xf32>
    %cst_41 = arith.constant 3.200000e+01 : f32
    %126 = vector.broadcast %cst_41 : f32 to vector<8x1xf32>
    %127 = arith.divf %125, %126 : vector<8x1xf32>
    %128 = vector.broadcast %127 : vector<8x1xf32> to vector<8x32xf32>
    %129 = arith.subf %123, %128 : vector<8x32xf32>
    %130 = arith.mulf %129, %129 : vector<8x32xf32>
    %cst_42 = arith.constant dense<0.000000e+00> : vector<8xf32>
    %131 = vector.multi_reduction <add>, %130, %cst_42 [1] : vector<8x32xf32> to vector<8xf32>
    %132 = vector.shape_cast %131 : vector<8xf32> to vector<8x1xf32>
    %cst_43 = arith.constant 3.200000e+01 : f32
    %133 = vector.broadcast %cst_43 : f32 to vector<8x1xf32>
    %134 = arith.divf %132, %133 : vector<8x1xf32>
    %135 = vector.broadcast %127 : vector<8x1xf32> to vector<8x32xf32>
    %136 = arith.subf %123, %135 : vector<8x32xf32>
    %cst_44 = arith.constant 9.99999974E-6 : f32
    %137 = vector.broadcast %cst_44 : f32 to vector<8x1xf32>
    %138 = arith.addf %134, %137 : vector<8x1xf32>
    %139 = math.rsqrt %138 : vector<8x1xf32>
    %140 = vector.broadcast %139 : vector<8x1xf32> to vector<8x32xf32>
    %141 = arith.mulf %136, %140 : vector<8x32xf32>
    %142 = vector.broadcast %11 : vector<1x32xf32> to vector<8x32xf32>
    %143 = arith.mulf %141, %142 : vector<8x32xf32>
    %144 = vector.broadcast %12 : vector<1x32xf32> to vector<8x32xf32>
    %145 = arith.addf %143, %144 : vector<8x32xf32>
    %146 = vector.extract_strided_slice %0 {offsets = [8, 0], sizes = [1, 96], strides = [1, 1]} : vector<18x128xf32> to vector<1x96xf32>
    %147 = vector.extract_strided_slice %0 {offsets = [9, 0], sizes = [1, 32], strides = [1, 1]} : vector<18x128xf32> to vector<1x32xf32>
    %148 = vector.extract_strided_slice %0 {offsets = [10, 0], sizes = [1, 32], strides = [1, 1]} : vector<18x128xf32> to vector<1x32xf32>
    %149 = vector.extract_strided_slice %0 {offsets = [11, 0], sizes = [1, 32], strides = [1, 1]} : vector<18x128xf32> to vector<1x32xf32>
    %150 = vector.extract_strided_slice %0 {offsets = [12, 0], sizes = [1, 128], strides = [1, 1]} : vector<18x128xf32> to vector<1x128xf32>
    %151 = vector.extract_strided_slice %0 {offsets = [13, 0], sizes = [1, 32], strides = [1, 1]} : vector<18x128xf32> to vector<1x32xf32>
    %152 = vector.extract_strided_slice %0 {offsets = [14, 0], sizes = [1, 32], strides = [1, 1]} : vector<18x128xf32> to vector<1x32xf32>
    %153 = vector.extract_strided_slice %0 {offsets = [15, 0], sizes = [1, 32], strides = [1, 1]} : vector<18x128xf32> to vector<1x32xf32>
    %154 = arith.truncf %145 : vector<8x32xf32> to vector<8x32xbf16>
    %c1 = arith.constant 1 : index
    %c0_45 = arith.constant 0 : index
    %c0_46 = arith.constant 0 : index
    %155 = vector.load %arg1[%c1, %c0_45, %c0_46] : memref<2x32x96xbf16, #tpu.memory_space<vmem>>, vector<1x32x96xbf16>
    %156 = vector.shape_cast %155 : vector<1x32x96xbf16> to vector<32x96xbf16>
    %cst_47 = arith.constant dense<0.000000e+00> : vector<8x96xf32>
    %157 = tpu.matmul %154, %156, %cst_47 {dimension_numbers = #tpu.dot_dimension_numbers<[1], [0], [0], [1], [0, 0, 1, 1], [], []>} : vector<8x32xbf16>, vector<32x96xbf16>, vector<8x96xf32> -> vector<8x96xf32>
    %158 = vector.broadcast %146 : vector<1x96xf32> to vector<8x96xf32>
    %159 = arith.addf %157, %158 : vector<8x96xf32>
    %160 = vector.extract_strided_slice %159 {offsets = [0, 0], sizes = [8, 8], strides = [1, 1]} : vector<8x96xf32> to vector<8x8xf32>
    %161 = vector.extract_strided_slice %159 {offsets = [0, 32], sizes = [8, 8], strides = [1, 1]} : vector<8x96xf32> to vector<8x8xf32>
    %162 = vector.extract_strided_slice %159 {offsets = [0, 64], sizes = [8, 8], strides = [1, 1]} : vector<8x96xf32> to vector<8x8xf32>
    %cst_48 = arith.constant dense<0.000000e+00> : vector<8x8xf32>
    %163 = tpu.matmul %160, %161, %cst_48 {dimension_numbers = #tpu.dot_dimension_numbers<[1], [1], [0], [0], [0, 0, 1, 0], [], []>} : vector<8x8xf32>, vector<8x8xf32>, vector<8x8xf32> -> vector<8x8xf32>
    %cst_49 = arith.constant dense<0xFF800000> : vector<8xf32>
    %164 = vector.multi_reduction <maximumf>, %163, %cst_49 [1] : vector<8x8xf32> to vector<8xf32>
    %165 = vector.shape_cast %164 : vector<8xf32> to vector<8x1xf32>
    %166 = vector.broadcast %165 : vector<8x1xf32> to vector<8x8xf32>
    %167 = arith.subf %163, %166 : vector<8x8xf32>
    %168 = math.exp %167 : vector<8x8xf32>
    %cst_50 = arith.constant dense<0.000000e+00> : vector<8xf32>
    %169 = vector.multi_reduction <add>, %168, %cst_50 [1] : vector<8x8xf32> to vector<8xf32>
    %170 = vector.shape_cast %169 : vector<8xf32> to vector<8x1xf32>
    %171 = tpu.reciprocal %170 {approx = true} : vector<8x1xf32> -> vector<8x1xf32>
    %172 = vector.broadcast %171 : vector<8x1xf32> to vector<8x8xf32>
    %173 = arith.mulf %168, %172 : vector<8x8xf32>
    %cst_51 = arith.constant dense<0.000000e+00> : vector<8x8xf32>
    %174 = tpu.matmul %173, %162, %cst_51 {dimension_numbers = #tpu.dot_dimension_numbers<[1], [0], [0], [1], [0, 0, 1, 1], [], []>} : vector<8x8xf32>, vector<8x8xf32>, vector<8x8xf32> -> vector<8x8xf32>
    %175 = vector.extract_strided_slice %159 {offsets = [0, 8], sizes = [8, 8], strides = [1, 1]} : vector<8x96xf32> to vector<8x8xf32>
    %176 = vector.extract_strided_slice %159 {offsets = [0, 40], sizes = [8, 8], strides = [1, 1]} : vector<8x96xf32> to vector<8x8xf32>
    %177 = vector.extract_strided_slice %159 {offsets = [0, 72], sizes = [8, 8], strides = [1, 1]} : vector<8x96xf32> to vector<8x8xf32>
    %cst_52 = arith.constant dense<0.000000e+00> : vector<8x8xf32>
    %178 = tpu.matmul %175, %176, %cst_52 {dimension_numbers = #tpu.dot_dimension_numbers<[1], [1], [0], [0], [0, 0, 1, 0], [], []>} : vector<8x8xf32>, vector<8x8xf32>, vector<8x8xf32> -> vector<8x8xf32>
    %cst_53 = arith.constant dense<0xFF800000> : vector<8xf32>
    %179 = vector.multi_reduction <maximumf>, %178, %cst_53 [1] : vector<8x8xf32> to vector<8xf32>
    %180 = vector.shape_cast %179 : vector<8xf32> to vector<8x1xf32>
    %181 = vector.broadcast %180 : vector<8x1xf32> to vector<8x8xf32>
    %182 = arith.subf %178, %181 : vector<8x8xf32>
    %183 = math.exp %182 : vector<8x8xf32>
    %cst_54 = arith.constant dense<0.000000e+00> : vector<8xf32>
    %184 = vector.multi_reduction <add>, %183, %cst_54 [1] : vector<8x8xf32> to vector<8xf32>
    %185 = vector.shape_cast %184 : vector<8xf32> to vector<8x1xf32>
    %186 = tpu.reciprocal %185 {approx = true} : vector<8x1xf32> -> vector<8x1xf32>
    %187 = vector.broadcast %186 : vector<8x1xf32> to vector<8x8xf32>
    %188 = arith.mulf %183, %187 : vector<8x8xf32>
    %cst_55 = arith.constant dense<0.000000e+00> : vector<8x8xf32>
    %189 = tpu.matmul %188, %177, %cst_55 {dimension_numbers = #tpu.dot_dimension_numbers<[1], [0], [0], [1], [0, 0, 1, 1], [], []>} : vector<8x8xf32>, vector<8x8xf32>, vector<8x8xf32> -> vector<8x8xf32>
    %190 = vector.extract_strided_slice %159 {offsets = [0, 16], sizes = [8, 8], strides = [1, 1]} : vector<8x96xf32> to vector<8x8xf32>
    %191 = vector.extract_strided_slice %159 {offsets = [0, 48], sizes = [8, 8], strides = [1, 1]} : vector<8x96xf32> to vector<8x8xf32>
    %192 = vector.extract_strided_slice %159 {offsets = [0, 80], sizes = [8, 8], strides = [1, 1]} : vector<8x96xf32> to vector<8x8xf32>
    %cst_56 = arith.constant dense<0.000000e+00> : vector<8x8xf32>
    %193 = tpu.matmul %190, %191, %cst_56 {dimension_numbers = #tpu.dot_dimension_numbers<[1], [1], [0], [0], [0, 0, 1, 0], [], []>} : vector<8x8xf32>, vector<8x8xf32>, vector<8x8xf32> -> vector<8x8xf32>
    %cst_57 = arith.constant dense<0xFF800000> : vector<8xf32>
    %194 = vector.multi_reduction <maximumf>, %193, %cst_57 [1] : vector<8x8xf32> to vector<8xf32>
    %195 = vector.shape_cast %194 : vector<8xf32> to vector<8x1xf32>
    %196 = vector.broadcast %195 : vector<8x1xf32> to vector<8x8xf32>
    %197 = arith.subf %193, %196 : vector<8x8xf32>
    %198 = math.exp %197 : vector<8x8xf32>
    %cst_58 = arith.constant dense<0.000000e+00> : vector<8xf32>
    %199 = vector.multi_reduction <add>, %198, %cst_58 [1] : vector<8x8xf32> to vector<8xf32>
    %200 = vector.shape_cast %199 : vector<8xf32> to vector<8x1xf32>
    %201 = tpu.reciprocal %200 {approx = true} : vector<8x1xf32> -> vector<8x1xf32>
    %202 = vector.broadcast %201 : vector<8x1xf32> to vector<8x8xf32>
    %203 = arith.mulf %198, %202 : vector<8x8xf32>
    %cst_59 = arith.constant dense<0.000000e+00> : vector<8x8xf32>
    %204 = tpu.matmul %203, %192, %cst_59 {dimension_numbers = #tpu.dot_dimension_numbers<[1], [0], [0], [1], [0, 0, 1, 1], [], []>} : vector<8x8xf32>, vector<8x8xf32>, vector<8x8xf32> -> vector<8x8xf32>
    %205 = vector.extract_strided_slice %159 {offsets = [0, 24], sizes = [8, 8], strides = [1, 1]} : vector<8x96xf32> to vector<8x8xf32>
    %206 = vector.extract_strided_slice %159 {offsets = [0, 56], sizes = [8, 8], strides = [1, 1]} : vector<8x96xf32> to vector<8x8xf32>
    %207 = vector.extract_strided_slice %159 {offsets = [0, 88], sizes = [8, 8], strides = [1, 1]} : vector<8x96xf32> to vector<8x8xf32>
    %cst_60 = arith.constant dense<0.000000e+00> : vector<8x8xf32>
    %208 = tpu.matmul %205, %206, %cst_60 {dimension_numbers = #tpu.dot_dimension_numbers<[1], [1], [0], [0], [0, 0, 1, 0], [], []>} : vector<8x8xf32>, vector<8x8xf32>, vector<8x8xf32> -> vector<8x8xf32>
    %cst_61 = arith.constant dense<0xFF800000> : vector<8xf32>
    %209 = vector.multi_reduction <maximumf>, %208, %cst_61 [1] : vector<8x8xf32> to vector<8xf32>
    %210 = vector.shape_cast %209 : vector<8xf32> to vector<8x1xf32>
    %211 = vector.broadcast %210 : vector<8x1xf32> to vector<8x8xf32>
    %212 = arith.subf %208, %211 : vector<8x8xf32>
    %213 = math.exp %212 : vector<8x8xf32>
    %cst_62 = arith.constant dense<0.000000e+00> : vector<8xf32>
    %214 = vector.multi_reduction <add>, %213, %cst_62 [1] : vector<8x8xf32> to vector<8xf32>
    %215 = vector.shape_cast %214 : vector<8xf32> to vector<8x1xf32>
    %216 = tpu.reciprocal %215 {approx = true} : vector<8x1xf32> -> vector<8x1xf32>
    %217 = vector.broadcast %216 : vector<8x1xf32> to vector<8x8xf32>
    %218 = arith.mulf %213, %217 : vector<8x8xf32>
    %cst_63 = arith.constant dense<0.000000e+00> : vector<8x8xf32>
    %219 = tpu.matmul %218, %207, %cst_63 {dimension_numbers = #tpu.dot_dimension_numbers<[1], [0], [0], [1], [0, 0, 1, 1], [], []>} : vector<8x8xf32>, vector<8x8xf32>, vector<8x8xf32> -> vector<8x8xf32>
    %220 = tpu.concatenate %174, %189, %204, %219 in 1 : vector<8x8xf32>, vector<8x8xf32>, vector<8x8xf32>, vector<8x8xf32> -> vector<8x32xf32>
    %221 = arith.truncf %220 : vector<8x32xf32> to vector<8x32xbf16>
    %c1_64 = arith.constant 1 : index
    %c0_65 = arith.constant 0 : index
    %c0_66 = arith.constant 0 : index
    %222 = vector.load %arg2[%c1_64, %c0_65, %c0_66] : memref<2x32x32xbf16, #tpu.memory_space<vmem>>, vector<1x32x32xbf16>
    %223 = vector.shape_cast %222 : vector<1x32x32xbf16> to vector<32x32xbf16>
    %cst_67 = arith.constant dense<0.000000e+00> : vector<8x32xf32>
    %224 = tpu.matmul %221, %223, %cst_67 {dimension_numbers = #tpu.dot_dimension_numbers<[1], [0], [0], [1], [0, 0, 1, 1], [], []>} : vector<8x32xbf16>, vector<32x32xbf16>, vector<8x32xf32> -> vector<8x32xf32>
    %225 = vector.broadcast %147 : vector<1x32xf32> to vector<8x32xf32>
    %226 = arith.addf %224, %225 : vector<8x32xf32>
    %227 = arith.addf %145, %226 : vector<8x32xf32>
    %cst_68 = arith.constant dense<0.000000e+00> : vector<8xf32>
    %228 = vector.multi_reduction <add>, %227, %cst_68 [1] : vector<8x32xf32> to vector<8xf32>
    %229 = vector.shape_cast %228 : vector<8xf32> to vector<8x1xf32>
    %cst_69 = arith.constant 3.200000e+01 : f32
    %230 = vector.broadcast %cst_69 : f32 to vector<8x1xf32>
    %231 = arith.divf %229, %230 : vector<8x1xf32>
    %232 = vector.broadcast %231 : vector<8x1xf32> to vector<8x32xf32>
    %233 = arith.subf %227, %232 : vector<8x32xf32>
    %234 = arith.mulf %233, %233 : vector<8x32xf32>
    %cst_70 = arith.constant dense<0.000000e+00> : vector<8xf32>
    %235 = vector.multi_reduction <add>, %234, %cst_70 [1] : vector<8x32xf32> to vector<8xf32>
    %236 = vector.shape_cast %235 : vector<8xf32> to vector<8x1xf32>
    %cst_71 = arith.constant 3.200000e+01 : f32
    %237 = vector.broadcast %cst_71 : f32 to vector<8x1xf32>
    %238 = arith.divf %236, %237 : vector<8x1xf32>
    %239 = vector.broadcast %231 : vector<8x1xf32> to vector<8x32xf32>
    %240 = arith.subf %227, %239 : vector<8x32xf32>
    %cst_72 = arith.constant 9.99999974E-6 : f32
    %241 = vector.broadcast %cst_72 : f32 to vector<8x1xf32>
    %242 = arith.addf %238, %241 : vector<8x1xf32>
    %243 = math.rsqrt %242 : vector<8x1xf32>
    %244 = vector.broadcast %243 : vector<8x1xf32> to vector<8x32xf32>
    %245 = arith.mulf %240, %244 : vector<8x32xf32>
    %246 = vector.broadcast %148 : vector<1x32xf32> to vector<8x32xf32>
    %247 = arith.mulf %245, %246 : vector<8x32xf32>
    %248 = vector.broadcast %149 : vector<1x32xf32> to vector<8x32xf32>
    %249 = arith.addf %247, %248 : vector<8x32xf32>
    %250 = arith.truncf %249 : vector<8x32xf32> to vector<8x32xbf16>
    %c1_73 = arith.constant 1 : index
    %c0_74 = arith.constant 0 : index
    %c0_75 = arith.constant 0 : index
    %251 = vector.load %arg3[%c1_73, %c0_74, %c0_75] : memref<2x32x128xbf16, #tpu.memory_space<vmem>>, vector<1x32x128xbf16>
    %252 = vector.shape_cast %251 : vector<1x32x128xbf16> to vector<32x128xbf16>
    %cst_76 = arith.constant dense<0.000000e+00> : vector<8x128xf32>
    %253 = tpu.matmul %250, %252, %cst_76 {dimension_numbers = #tpu.dot_dimension_numbers<[1], [0], [0], [1], [0, 0, 1, 1], [], []>} : vector<8x32xbf16>, vector<32x128xbf16>, vector<8x128xf32> -> vector<8x128xf32>
    %254 = vector.broadcast %150 : vector<1x128xf32> to vector<8x128xf32>
    %255 = arith.addf %253, %254 : vector<8x128xf32>
    %cst_77 = arith.constant 0.000000e+00 : f32
    %256 = vector.broadcast %cst_77 : f32 to vector<8x128xf32>
    %257 = arith.maximumf %255, %256 : vector<8x128xf32>
    %258 = arith.truncf %257 : vector<8x128xf32> to vector<8x128xbf16>
    %c1_78 = arith.constant 1 : index
    %c0_79 = arith.constant 0 : index
    %c0_80 = arith.constant 0 : index
    %259 = vector.load %arg4[%c1_78, %c0_79, %c0_80] : memref<2x128x32xbf16, #tpu.memory_space<vmem>>, vector<1x128x32xbf16>
    %260 = vector.shape_cast %259 : vector<1x128x32xbf16> to vector<128x32xbf16>
    %cst_81 = arith.constant dense<0.000000e+00> : vector<8x32xf32>
    %261 = tpu.matmul %258, %260, %cst_81 {dimension_numbers = #tpu.dot_dimension_numbers<[1], [0], [0], [1], [0, 0, 1, 1], [], []>} : vector<8x128xbf16>, vector<128x32xbf16>, vector<8x32xf32> -> vector<8x32xf32>
    %262 = vector.broadcast %151 : vector<1x32xf32> to vector<8x32xf32>
    %263 = arith.addf %261, %262 : vector<8x32xf32>
    %264 = arith.addf %249, %263 : vector<8x32xf32>
    %cst_82 = arith.constant dense<0.000000e+00> : vector<8xf32>
    %265 = vector.multi_reduction <add>, %264, %cst_82 [1] : vector<8x32xf32> to vector<8xf32>
    %266 = vector.shape_cast %265 : vector<8xf32> to vector<8x1xf32>
    %cst_83 = arith.constant 3.200000e+01 : f32
    %267 = vector.broadcast %cst_83 : f32 to vector<8x1xf32>
    %268 = arith.divf %266, %267 : vector<8x1xf32>
    %269 = vector.broadcast %268 : vector<8x1xf32> to vector<8x32xf32>
    %270 = arith.subf %264, %269 : vector<8x32xf32>
    %271 = arith.mulf %270, %270 : vector<8x32xf32>
    %cst_84 = arith.constant dense<0.000000e+00> : vector<8xf32>
    %272 = vector.multi_reduction <add>, %271, %cst_84 [1] : vector<8x32xf32> to vector<8xf32>
    %273 = vector.shape_cast %272 : vector<8xf32> to vector<8x1xf32>
    %cst_85 = arith.constant 3.200000e+01 : f32
    %274 = vector.broadcast %cst_85 : f32 to vector<8x1xf32>
    %275 = arith.divf %273, %274 : vector<8x1xf32>
    %276 = vector.broadcast %268 : vector<8x1xf32> to vector<8x32xf32>
    %277 = arith.subf %264, %276 : vector<8x32xf32>
    %cst_86 = arith.constant 9.99999974E-6 : f32
    %278 = vector.broadcast %cst_86 : f32 to vector<8x1xf32>
    %279 = arith.addf %275, %278 : vector<8x1xf32>
    %280 = math.rsqrt %279 : vector<8x1xf32>
    %281 = vector.broadcast %280 : vector<8x1xf32> to vector<8x32xf32>
    %282 = arith.mulf %277, %281 : vector<8x32xf32>
    %283 = vector.broadcast %152 : vector<1x32xf32> to vector<8x32xf32>
    %284 = arith.mulf %282, %283 : vector<8x32xf32>
    %285 = vector.broadcast %153 : vector<1x32xf32> to vector<8x32xf32>
    %286 = arith.addf %284, %285 : vector<8x32xf32>
    %287 = vector.extract_strided_slice %0 {offsets = [17, 0], sizes = [1, 16], strides = [1, 1]} : vector<18x128xf32> to vector<1x16xf32>
    %288 = arith.truncf %286 : vector<8x32xf32> to vector<8x32xbf16>
    %c0_87 = arith.constant 0 : index
    %c0_88 = arith.constant 0 : index
    %289 = vector.load %arg5[%c0_87, %c0_88] : memref<32x16xbf16, #tpu.memory_space<vmem>>, vector<32x16xbf16>
    %cst_89 = arith.constant dense<0.000000e+00> : vector<8x16xf32>
    %290 = tpu.matmul %288, %289, %cst_89 {dimension_numbers = #tpu.dot_dimension_numbers<[1], [0], [0], [1], [0, 0, 1, 1], [], []>} : vector<8x32xbf16>, vector<32x16xbf16>, vector<8x16xf32> -> vector<8x16xf32>
    %291 = vector.broadcast %287 : vector<1x16xf32> to vector<8x16xf32>
    %292 = arith.addf %290, %291 : vector<8x16xf32>
    %c0_90 = arith.constant 0 : index
    %c0_91 = arith.constant 0 : index
    %293 = vector.load %arg7[%c0_90, %c0_91] : memref<8x16xf32, #tpu.memory_space<vmem>>, vector<8x16xf32>
    tpu.vector_store %arg7[%c0_90, %c0_91], %292 {strides = array<i32>} : memref<8x16xf32, #tpu.memory_space<vmem>>, vector<8x16xf32>,
    return
  }
}

</mosaic_0001>

<llo_original>
// kernel: transformer_block_forward.1
$region0: #{transformer_block_forward.1}
  #allocation0 [shape = 'u32[]', space=smem, size = 0x4, offset = 0x4, fixed_abs, tag = 'smem constant byte address 0x4 - core index']
  #allocation1 [shape = 'u32[144,128]{1,0:T(1,128)}', space=vmem, size = 0x12000, scoped, tag = 'internal scratch']
  %s0 = inlined_call_operand.vmem [shape: f32[8,32], index: 0, kind: input, shape index: {}]
  %s1 = inlined_call_operand.vmem [shape: bf16[2,32,96], index: 1, kind: input, shape index: {}]
  %s2 = inlined_call_operand.vmem [shape: bf16[2,32,32], index: 2, kind: input, shape index: {}]
  %s3 = inlined_call_operand.vmem [shape: bf16[2,32,128], index: 3, kind: input, shape index: {}]
  %s4 = inlined_call_operand.vmem [shape: bf16[2,128,32], index: 4, kind: input, shape index: {}]
  %s5 = inlined_call_operand.vmem [shape: bf16[32,16], index: 5, kind: input, shape index: {}]
  %s6 = inlined_call_operand.vmem [shape: f32[18,128], index: 6, kind: input, shape index: {}]
  %s7 = inlined_call_operand.hbm [shape: f32[8,16], index: 7, kind: output, shape index: {}]
  %s8 = sld [smem:[#allocation0]]
  $region38: #{transformer_block_forward.1} parent=0
    _
  %s10 = ssub.s32 1, %s8
  %s11 = scalar_select 0, %s10, %s8
  $region1: #{transformer_block_forward.1} parent=0
    #allocation2 [shape = 'u8[4096]{0}', space=vmem, size = 0x1000, scoped, tag = 'output window, operand 0, single buffered']
    #allocation3 [shape = 's32[1]{0}', space=sflag, size = 0x4, scoped, tag = 'scoped memory for transformer_block_forward.1']
    %12 = vsyncpa [#allocation3], 0
    // Predicated region
    $region2: #{transformer_block_forward.1} parent=1 // pred_check
      _
    $region3: #{transformer_block_forward.1} parent=1 // pred_check_branch
      %14 = sbr.rel (0) target = $region5
    $region4: #{transformer_block_forward.1} parent=1 // pred_region
      _
    $region5: #{transformer_block_forward.1} parent=1 // pred_fallthru
      _
    // Predicated region
    $region6: #{transformer_block_forward.1} parent=1 // pred_check
      _
    $region7: #{transformer_block_forward.1} parent=1 // pred_check_branch
      %16 = sbr.rel (0) target = $region9
    $region8: #{transformer_block_forward.1} parent=1 // pred_region
      _
    $region9: #{transformer_block_forward.1} parent=1 // pred_fallthru
      _
    // Predicated region
    $region10: #{transformer_block_forward.1} parent=1 // pred_check
      _
    $region11: #{transformer_block_forward.1} parent=1 // pred_check_branch
      %18 = sbr.rel (0) target = $region13
    $region12: #{transformer_block_forward.1} parent=1 // pred_region
      _
    $region13: #{transformer_block_forward.1} parent=1 // pred_fallthru
      _
    // Predicated region
    $region14: #{transformer_block_forward.1} parent=1 // pred_check
      _
    $region15: #{transformer_block_forward.1} parent=1 // pred_check_branch
      %20 = sbr.rel (0) target = $region17
    $region16: #{transformer_block_forward.1} parent=1 // pred_region
      _
    $region17: #{transformer_block_forward.1} parent=1 // pred_fallthru
      _
    // Predicated region
    $region18: #{transformer_block_forward.1} parent=1 // pred_check
      _
    $region19: #{transformer_block_forward.1} parent=1 // pred_check_branch
      %22 = sbr.rel (0) target = $region21
    $region20: #{transformer_block_forward.1} parent=1 // pred_region
      _
    $region21: #{transformer_block_forward.1} parent=1 // pred_fallthru
      _
    // Predicated region
    $region22: #{transformer_block_forward.1} parent=1 // pred_check
      _
    $region23: #{transformer_block_forward.1} parent=1 // pred_check_branch
      %24 = sbr.rel (0) target = $region25
    $region24: #{transformer_block_forward.1} parent=1 // pred_region
      _
    $region25: #{transformer_block_forward.1} parent=1 // pred_fallthru
      _
    // Predicated region
    $region26: #{transformer_block_forward.1} parent=1 // pred_check
      _
    $region27: #{transformer_block_forward.1} parent=1 // pred_check_branch
      %26 = sbr.rel (0) target = $region29
    $region28: #{transformer_block_forward.1} parent=1 // pred_region
      _
    $region29: #{transformer_block_forward.1} parent=1 // pred_fallthru
      _
    %v28 = vld [vmem:[%s6] sm:$0xff]
    %v29 = vld [vmem:[%s6 + $0x8] sm:$0xff]
    %v30 = vld [vmem:[%s6 + $0x10] sm:$0x3]
    %v31 = vld [vmem:[%s0] sm:$0xff]
    %v32 = vlaneseq
    %v33 = vshrl.u32 %v32, 7
    %v34 = vsub.s32 0, %v33
    %v35 = vrot.slane %v30, %v34
    %v36 = vadd.f32 %v31, %v35
    %v37 = vpack.c.bf16 %v36, %v36
    %v38 = vld [vmem:[%s1] sm:$0xf]
    %v39 = vld [vmem:[%s1 + $0x4] sm:$0xf]
    %v40 = vld [vmem:[%s1 + $0x8] sm:$0xf]
    %v41 = vld [vmem:[%s1 + $0xc] sm:$0xf]
    %v42 = vlaneseq
    %v43 = vshrl.u32 %v42, 7
    %v44 = vsub.s32 0, %v43
    %v45 = vrot.slane %v28, %v44
    %v50 = vunpack.c.l.b16 %v38
    %v51 = vunpack.c.l.b16 %v39
    %v52 = vunpack.c.l.b16 %v40
    %v53 = vunpack.c.l.b16 %v41
    %v54 = vpack.c.b16 %v51, %v50
    %v55 = vpack.c.b16 %v53, %v52
    %vm58 = vcmask 261120
    %v60 = vsel %vm58, %v37, 0
    %62 = vmatprep.subr.bf16.mxu0 0
    %63 = vmatpush1.bf16.msra.mxu0 0
    %64 = vmatprep.subr.bf16.mxu0 0
    %65 = vmatpush1.bf16.msra.mxu0 0
    %66 = vmatprep.subr.bf16.mxu0 0
    %67 = vmatpush1.bf16.msra.mxu0 0
    %68 = vmatprep.subr.bf16.mxu0 0
    %69 = vmatpush1.bf16.msra.mxu0 0
    %70 = vmatprep.subr.bf16.mxu0 0
    %71 = vmatpush1.bf16.msra.mxu0 0
    %72 = vmatprep.subr.bf16.mxu0 0
    %73 = vmatpush1.bf16.msra.mxu0 0
    %74 = vmatprep.subr.bf16.mxu0 0
    %75 = vmatpush1.bf16.msra.mxu0 %v55
    %76 = vmatprep.subr.bf16.mxu0 0
    %77 = vmatpush1.bf16.msra.mxu0 %v54
    %78 = vmatprep.subr.bf16.mxu0 0
    %79 = vmatpush2.bf16.msra.mxu0 0
    %80 = vmatprep.subr.bf16.mxu0 0
    %81 = vmatpush2.bf16.msra.mxu0 0
    %82 = vmatprep.subr.bf16.mxu0 0
    %83 = vmatpush2.bf16.msra.mxu0 0
    %84 = vmatprep.subr.bf16.mxu0 0
    %85 = vmatpush2.bf16.msra.mxu0 0
    %86 = vmatprep.subr.bf16.mxu0 0
    %87 = vmatpush2.bf16.msra.mxu0 0
    %88 = vmatprep.subr.bf16.mxu0 0
    %89 = vmatpush2.bf16.msra.mxu0 0
    %90 = vmatprep.subr.bf16.mxu0 0
    %91 = vmatpush2.bf16.msra.mxu0 0
    %92 = vmatprep.subr.bf16.mxu0 0
    %93 = vmatpush2.bf16.msra.mxu0 0
    %94 = vmatprep.mubr.bf16.mxu0 0
    %95 = vmatmul.mubr.bf16.gmra.mxu0 %v60
    %v96 = vpop.f32.mrf.mxu0
    %v97 = vadd.f32 %v45, %v96
    %v98 = vpop.f32.mrf.mxu0
    %v99 = vpop.f32.mrf.mxu0
    %v100 = vpop.f32.mrf.mxu0
    %101 = vdwg.mxu0
    %103 = vrot.lane.b32.xlu0 %v97, 96
    %v104 = vpop.permute.xlu0 %103
    %vm105 = vcmask 64512
    %v106 = vsel %vm105, %v97, 0
    %v108 = vsel %vm105, %v104, 0
    %110 = vmatprep.subr.mxu0 0.0
    %111 = vmatpush1.xpose.msra.mxu0 0.0
    %112 = vmatprep.subr.mxu0 0.0
    %113 = vmatpush1.xpose.msra.mxu0 0.0
    %114 = vmatprep.subr.mxu0 0.0
    %115 = vmatpush1.xpose.msra.mxu0 0.0
    %116 = vmatprep.subr.mxu0 0.0
    %117 = vmatpush1.xpose.msra.mxu0 0.0
    %118 = vmatprep.subr.mxu0 0.0
    %119 = vmatpush1.xpose.msra.mxu0 0.0
    %120 = vmatprep.subr.mxu0 0.0
    %121 = vmatpush1.xpose.msra.mxu0 0.0
    %122 = vmatprep.subr.mxu0 0.0
    %123 = vmatpush1.xpose.msra.mxu0 0.0
    %124 = vmatprep.subr.mxu0 0.0
    %125 = vmatpush1.xpose.msra.mxu0 0.0
    %126 = vmatprep.subr.mxu0 0.0
    %127 = vmatpush1.xpose.msra.mxu0 0.0
    %128 = vmatprep.subr.mxu0 0.0
    %129 = vmatpush1.xpose.msra.mxu0 0.0
    %130 = vmatprep.subr.mxu0 0.0
    %131 = vmatpush1.xpose.msra.mxu0 0.0
    %132 = vmatprep.subr.mxu0 0.0
    %133 = vmatpush1.xpose.msra.mxu0 0.0
    %134 = vmatprep.subr.mxu0 0.0
    %135 = vmatpush1.xpose.msra.mxu0 0.0
    %136 = vmatprep.subr.mxu0 0.0
    %137 = vmatpush1.xpose.msra.mxu0 0.0
    %138 = vmatprep.subr.mxu0 0.0
    %139 = vmatpush1.xpose.msra.mxu0 0.0
    %140 = vmatprep.subr.mxu0 0.0
    %141 = vmatpush1.xpose.msra.mxu0 %v108
    %142 = vmatprep.subr.mxu0 0.0
    %143 = vmatpush2.xpose.msra.mxu0 0.0
    %144 = vmatprep.subr.mxu0 0.0
    %145 = vmatpush2.xpose.msra.mxu0 0.0
    %146 = vmatprep.subr.mxu0 0.0
    %147 = vmatpush2.xpose.msra.mxu0 0.0
    %148 = vmatprep.subr.mxu0 0.0
    %149 = vmatpush2.xpose.msra.mxu0 0.0
    %150 = vmatprep.subr.mxu0 0.0
    %151 = vmatpush2.xpose.msra.mxu0 0.0
    %152 = vmatprep.subr.mxu0 0.0
    %153 = vmatpush2.xpose.msra.mxu0 0.0
    %154 = vmatprep.subr.mxu0 0.0
    %155 = vmatpush2.xpose.msra.mxu0 0.0
    %156 = vmatprep.subr.mxu0 0.0
    %157 = vmatpush2.xpose.msra.mxu0 0.0
    %158 = vmatprep.subr.mxu0 0.0
    %159 = vmatpush2.xpose.msra.mxu0 0.0
    %160 = vmatprep.subr.mxu0 0.0
    %161 = vmatpush2.xpose.msra.mxu0 0.0
    %162 = vmatprep.subr.mxu0 0.0
    %163 = vmatpush2.xpose.msra.mxu0 0.0
    %164 = vmatprep.subr.mxu0 0.0
    %165 = vmatpush2.xpose.msra.mxu0 0.0
    %166 = vmatprep.subr.mxu0 0.0
    %167 = vmatpush2.xpose.msra.mxu0 0.0
    %168 = vmatprep.subr.mxu0 0.0
    %169 = vmatpush2.xpose.msra.mxu0 0.0
    %170 = vmatprep.subr.mxu0 0.0
    %171 = vmatpush2.xpose.msra.mxu0 0.0
    %172 = vmatprep.subr.mxu0 0.0
    %173 = vmatpush2.xpose.msra.mxu0 0.0
    %174 = vmatprep.mubr.f32.mxu0 0.0
    %175 = vmatmul.mubr.f32.gmra.mxu0 %v106
    %v176 = vpop.f32.mrf.mxu0
    %v177 = vadd.f32 0.0, %v176
    %v178 = vpop.f32.mrf.mxu0
    %179 = vdwg.mxu0
    %v180 = vsel %vm105, %v177, -inf
    %181 = vmax.xlane.f32.xlu0 %v180
    %v182 = vpop.xlane.xlu0 %181
    %v183 = vsub.f32 %v177, %v182
    %v184 = vmul.f32 %v183, 1.442695
    %v185 = vpow.pop %v184
    %v186 = vsel %vm105, %v185, 0.0
    %187 = vadd.xlane.f32.xlu0 %v186
    %v188 = vpop.xlane.xlu0 %187
    %v189 = vrcp.pop %v188
    %v190 = vmul.f32 %v185, %v189
    %191 = vrot.lane.b32.xlu0 %v97, 64
    %v192 = vpop.permute.xlu0 %191
    %v195 = vsel %vm105, %v190, 0
    %197 = vmatprep.subr.mxu0 0.0
    %198 = vmatpush1.msra.mxu0 0.0
    %199 = vmatprep.subr.mxu0 0.0
    %200 = vmatpush1.msra.mxu0 0.0
    %201 = vmatprep.subr.mxu0 0.0
    %202 = vmatpush1.msra.mxu0 0.0
    %203 = vmatprep.subr.mxu0 0.0
    %204 = vmatpush1.msra.mxu0 0.0
    %205 = vmatprep.subr.mxu0 0.0
    %206 = vmatpush1.msra.mxu0 0.0
    %207 = vmatprep.subr.mxu0 0.0
    %208 = vmatpush1.msra.mxu0 0.0
    %209 = vmatprep.subr.mxu0 0.0
    %210 = vmatpush1.msra.mxu0 0.0
    %211 = vmatprep.subr.mxu0 0.0
    %212 = vmatpush1.msra.mxu0 0.0
    %213 = vmatprep.subr.mxu0 0.0
    %214 = vmatpush1.msra.mxu0 0.0
    %215 = vmatprep.subr.mxu0 0.0
    %216 = vmatpush1.msra.mxu0 0.0
    %217 = vmatprep.subr.mxu0 0.0
    %218 = vmatpush1.msra.mxu0 0.0
    %219 = vmatprep.subr.mxu0 0.0
    %220 = vmatpush1.msra.mxu0 0.0
    %221 = vmatprep.subr.mxu0 0.0
    %222 = vmatpush1.msra.mxu0 0.0
    %223 = vmatprep.subr.mxu0 0.0
    %224 = vmatpush1.msra.mxu0 0.0
    %225 = vmatprep.subr.mxu0 0.0
    %226 = vmatpush1.msra.mxu0 0.0
    %227 = vmatprep.subr.mxu0 0.0
    %228 = vmatpush1.msra.mxu0 %v192
    %229 = vmatprep.subr.mxu0 0.0
    %230 = vmatpush2.msra.mxu0 0.0
    %231 = vmatprep.subr.mxu0 0.0
    %232 = vmatpush2.msra.mxu0 0.0
    %233 = vmatprep.subr.mxu0 0.0
    %234 = vmatpush2.msra.mxu0 0.0
    %235 = vmatprep.subr.mxu0 0.0
    %236 = vmatpush2.msra.mxu0 0.0
    %237 = vmatprep.subr.mxu0 0.0
    %238 = vmatpush2.msra.mxu0 0.0
    %239 = vmatprep.subr.mxu0 0.0
    %240 = vmatpush2.msra.mxu0 0.0
    %241 = vmatprep.subr.mxu0 0.0
    %242 = vmatpush2.msra.mxu0 0.0
    %243 = vmatprep.subr.mxu0 0.0
    %244 = vmatpush2.msra.mxu0 0.0
    %245 = vmatprep.subr.mxu0 0.0
    %246 = vmatpush2.msra.mxu0 0.0
    %247 = vmatprep.subr.mxu0 0.0
    %248 = vmatpush2.msra.mxu0 0.0
    %249 = vmatprep.subr.mxu0 0.0
    %250 = vmatpush2.msra.mxu0 0.0
    %251 = vmatprep.subr.mxu0 0.0
    %252 = vmatpush2.msra.mxu0 0.0
    %253 = vmatprep.subr.mxu0 0.0
    %254 = vmatpush2.msra.mxu0 0.0
    %255 = vmatprep.subr.mxu0 0.0
    %256 = vmatpush2.msra.mxu0 0.0
    %257 = vmatprep.subr.mxu0 0.0
    %258 = vmatpush2.msra.mxu0 0.0
    %259 = vmatprep.subr.mxu0 0.0
    %260 = vmatpush2.msra.mxu0 0.0
    %261 = vmatprep.mubr.f32.mxu0 0.0
    %262 = vmatmul.mubr.f32.gmra.mxu0 %v195
    %v263 = vpop.f32.mrf.mxu0
    %v264 = vadd.f32 0.0, %v263
    %v265 = vpop.f32.mrf.mxu0
    %266 = vdwg.mxu0
    %267 = vrot.lane.b32.xlu0 %v97, 120
    %v268 = vpop.permute.xlu0 %267
    %269 = vrot.lane.b32.xlu0 %v97, 88
    %v270 = vpop.permute.xlu0 %269
    %v271 = vsel %vm105, %v268, 0
    %v273 = vsel %vm105, %v270, 0
    %275 = vmatprep.subr.mxu0 0.0
    %276 = vmatpush1.xpose.msra.mxu0 0.0
    %277 = vmatprep.subr.mxu0 0.0
    %278 = vmatpush1.xpose.msra.mxu0 0.0
    %279 = vmatprep.subr.mxu0 0.0
    %280 = vmatpush1.xpose.msra.mxu0 0.0
    %281 = vmatprep.subr.mxu0 0.0
    %282 = vmatpush1.xpose.msra.mxu0 0.0
    %283 = vmatprep.subr.mxu0 0.0
    %284 = vmatpush1.xpose.msra.mxu0 0.0
    %285 = vmatprep.subr.mxu0 0.0
    %286 = vmatpush1.xpose.msra.mxu0 0.0
    %287 = vmatprep.subr.mxu0 0.0
    %288 = vmatpush1.xpose.msra.mxu0 0.0
    %289 = vmatprep.subr.mxu0 0.0
    %290 = vmatpush1.xpose.msra.mxu0 0.0
    %291 = vmatprep.subr.mxu0 0.0
    %292 = vmatpush1.xpose.msra.mxu0 0.0
    %293 = vmatprep.subr.mxu0 0.0
    %294 = vmatpush1.xpose.msra.mxu0 0.0
    %295 = vmatprep.subr.mxu0 0.0
    %296 = vmatpush1.xpose.msra.mxu0 0.0
    %297 = vmatprep.subr.mxu0 0.0
    %298 = vmatpush1.xpose.msra.mxu0 0.0
    %299 = vmatprep.subr.mxu0 0.0
    %300 = vmatpush1.xpose.msra.mxu0 0.0
    %301 = vmatprep.subr.mxu0 0.0
    %302 = vmatpush1.xpose.msra.mxu0 0.0
    %303 = vmatprep.subr.mxu0 0.0
    %304 = vmatpush1.xpose.msra.mxu0 0.0
    %305 = vmatprep.subr.mxu0 0.0
    %306 = vmatpush1.xpose.msra.mxu0 %v273
    %307 = vmatprep.subr.mxu0 0.0
    %308 = vmatpush2.xpose.msra.mxu0 0.0
    %309 = vmatprep.subr.mxu0 0.0
    %310 = vmatpush2.xpose.msra.mxu0 0.0
    %311 = vmatprep.subr.mxu0 0.0
    %312 = vmatpush2.xpose.msra.mxu0 0.0
    %313 = vmatprep.subr.mxu0 0.0
    %314 = vmatpush2.xpose.msra.mxu0 0.0
    %315 = vmatprep.subr.mxu0 0.0
    %316 = vmatpush2.xpose.msra.mxu0 0.0
    %317 = vmatprep.subr.mxu0 0.0
    %318 = vmatpush2.xpose.msra.mxu0 0.0
    %319 = vmatprep.subr.mxu0 0.0
    %320 = vmatpush2.xpose.msra.mxu0 0.0
    %321 = vmatprep.subr.mxu0 0.0
    %322 = vmatpush2.xpose.msra.mxu0 0.0
    %323 = vmatprep.subr.mxu0 0.0
    %324 = vmatpush2.xpose.msra.mxu0 0.0
    %325 = vmatprep.subr.mxu0 0.0
    %326 = vmatpush2.xpose.msra.mxu0 0.0
    %327 = vmatprep.subr.mxu0 0.0
    %328 = vmatpush2.xpose.msra.mxu0 0.0
    %329 = vmatprep.subr.mxu0 0.0
    %330 = vmatpush2.xpose.msra.mxu0 0.0
    %331 = vmatprep.subr.mxu0 0.0
    %332 = vmatpush2.xpose.msra.mxu0 0.0
    %333 = vmatprep.subr.mxu0 0.0
    %334 = vmatpush2.xpose.msra.mxu0 0.0
    %335 = vmatprep.subr.mxu0 0.0
    %336 = vmatpush2.xpose.msra.mxu0 0.0
    %337 = vmatprep.subr.mxu0 0.0
    %338 = vmatpush2.xpose.msra.mxu0 0.0
    %339 = vmatprep.mubr.f32.mxu0 0.0
    %340 = vmatmul.mubr.f32.gmra.mxu0 %v271
    %v341 = vpop.f32.mrf.mxu0
    %v342 = vadd.f32 0.0, %v341
    %v343 = vpop.f32.mrf.mxu0
    %344 = vdwg.mxu0
    %v345 = vsel %vm105, %v342, -inf
    %346 = vmax.xlane.f32.xlu0 %v345
    %v347 = vpop.xlane.xlu0 %346
    %v348 = vsub.f32 %v342, %v347
    %v349 = vmul.f32 %v348, 1.442695
    %v350 = vpow.pop %v349
    %v351 = vsel %vm105, %v350, 0.0
    %352 = vadd.xlane.f32.xlu0 %v351
    %v353 = vpop.xlane.xlu0 %352
    %v354 = vrcp.pop %v353
    %v355 = vmul.f32 %v350, %v354
    %356 = vrot.lane.b32.xlu0 %v97, 56
    %v357 = vpop.permute.xlu0 %356
    %v360 = vsel %vm105, %v355, 0
    %362 = vmatprep.subr.mxu0 0.0
    %363 = vmatpush1.msra.mxu0 0.0
    %364 = vmatprep.subr.mxu0 0.0
    %365 = vmatpush1.msra.mxu0 0.0
    %366 = vmatprep.subr.mxu0 0.0
    %367 = vmatpush1.msra.mxu0 0.0
    %368 = vmatprep.subr.mxu0 0.0
    %369 = vmatpush1.msra.mxu0 0.0
    %370 = vmatprep.subr.mxu0 0.0
    %371 = vmatpush1.msra.mxu0 0.0
    %372 = vmatprep.subr.mxu0 0.0
    %373 = vmatpush1.msra.mxu0 0.0
    %374 = vmatprep.subr.mxu0 0.0
    %375 = vmatpush1.msra.mxu0 0.0
    %376 = vmatprep.subr.mxu0 0.0
    %377 = vmatpush1.msra.mxu0 0.0
    %378 = vmatprep.subr.mxu0 0.0
    %379 = vmatpush1.msra.mxu0 0.0
    %380 = vmatprep.subr.mxu0 0.0
    %381 = vmatpush1.msra.mxu0 0.0
    %382 = vmatprep.subr.mxu0 0.0
    %383 = vmatpush1.msra.mxu0 0.0
    %384 = vmatprep.subr.mxu0 0.0
    %385 = vmatpush1.msra.mxu0 0.0
    %386 = vmatprep.subr.mxu0 0.0
    %387 = vmatpush1.msra.mxu0 0.0
    %388 = vmatprep.subr.mxu0 0.0
    %389 = vmatpush1.msra.mxu0 0.0
    %390 = vmatprep.subr.mxu0 0.0
    %391 = vmatpush1.msra.mxu0 0.0
    %392 = vmatprep.subr.mxu0 0.0
    %393 = vmatpush1.msra.mxu0 %v357
    %394 = vmatprep.subr.mxu0 0.0
    %395 = vmatpush2.msra.mxu0 0.0
    %396 = vmatprep.subr.mxu0 0.0
    %397 = vmatpush2.msra.mxu0 0.0
    %398 = vmatprep.subr.mxu0 0.0
    %399 = vmatpush2.msra.mxu0 0.0
    %400 = vmatprep.subr.mxu0 0.0
    %401 = vmatpush2.msra.mxu0 0.0
    %402 = vmatprep.subr.mxu0 0.0
    %403 = vmatpush2.msra.mxu0 0.0
    %404 = vmatprep.subr.mxu0 0.0
    %405 = vmatpush2.msra.mxu0 0.0
    %406 = vmatprep.subr.mxu0 0.0
    %407 = vmatpush2.msra.mxu0 0.0
    %408 = vmatprep.subr.mxu0 0.0
    %409 = vmatpush2.msra.mxu0 0.0
    %410 = vmatprep.subr.mxu0 0.0
    %411 = vmatpush2.msra.mxu0 0.0
    %412 = vmatprep.subr.mxu0 0.0
    %413 = vmatpush2.msra.mxu0 0.0
    %414 = vmatprep.subr.mxu0 0.0
    %415 = vmatpush2.msra.mxu0 0.0
    %416 = vmatprep.subr.mxu0 0.0
    %417 = vmatpush2.msra.mxu0 0.0
    %418 = vmatprep.subr.mxu0 0.0
    %419 = vmatpush2.msra.mxu0 0.0
    %420 = vmatprep.subr.mxu0 0.0
    %421 = vmatpush2.msra.mxu0 0.0
    %422 = vmatprep.subr.mxu0 0.0
    %423 = vmatpush2.msra.mxu0 0.0
    %424 = vmatprep.subr.mxu0 0.0
    %425 = vmatpush2.msra.mxu0 0.0
    %426 = vmatprep.mubr.f32.mxu0 0.0
    %427 = vmatmul.mubr.f32.gmra.mxu0 %v360
    %v428 = vpop.f32.mrf.mxu0
    %v429 = vadd.f32 0.0, %v428
    %v430 = vpop.f32.mrf.mxu0
    %431 = vdwg.mxu0
    %432 = vrot.lane.b32.xlu0 %v97, 112
    %v433 = vpop.permute.xlu0 %432
    %434 = vrot.lane.b32.xlu0 %v97, 80
    %v435 = vpop.permute.xlu0 %434
    %v436 = vsel %vm105, %v433, 0
    %v438 = vsel %vm105, %v435, 0
    %440 = vmatprep.subr.mxu0 0.0
    %441 = vmatpush1.xpose.msra.mxu0 0.0
    %442 = vmatprep.subr.mxu0 0.0
    %443 = vmatpush1.xpose.msra.mxu0 0.0
    %444 = vmatprep.subr.mxu0 0.0
    %445 = vmatpush1.xpose.msra.mxu0 0.0
    %446 = vmatprep.subr.mxu0 0.0
    %447 = vmatpush1.xpose.msra.mxu0 0.0
    %448 = vmatprep.subr.mxu0 0.0
    %449 = vmatpush1.xpose.msra.mxu0 0.0
    %450 = vmatprep.subr.mxu0 0.0
    %451 = vmatpush1.xpose.msra.mxu0 0.0
    %452 = vmatprep.subr.mxu0 0.0
    %453 = vmatpush1.xpose.msra.mxu0 0.0
    %454 = vmatprep.subr.mxu0 0.0
    %455 = vmatpush1.xpose.msra.mxu0 0.0
    %456 = vmatprep.subr.mxu0 0.0
    %457 = vmatpush1.xpose.msra.mxu0 0.0
    %458 = vmatprep.subr.mxu0 0.0
    %459 = vmatpush1.xpose.msra.mxu0 0.0
    %460 = vmatprep.subr.mxu0 0.0
    %461 = vmatpush1.xpose.msra.mxu0 0.0
    %462 = vmatprep.subr.mxu0 0.0
    %463 = vmatpush1.xpose.msra.mxu0 0.0
    %464 = vmatprep.subr.mxu0 0.0
    %465 = vmatpush1.xpose.msra.mxu0 0.0
    %466 = vmatprep.subr.mxu0 0.0
    %467 = vmatpush1.xpose.msra.mxu0 0.0
    %468 = vmatprep.subr.mxu0 0.0
    %469 = vmatpush1.xpose.msra.mxu0 0.0
    %470 = vmatprep.subr.mxu0 0.0
    %471 = vmatpush1.xpose.msra.mxu0 %v438
    %472 = vmatprep.subr.mxu0 0.0
    %473 = vmatpush2.xpose.msra.mxu0 0.0
    %474 = vmatprep.subr.mxu0 0.0
    %475 = vmatpush2.xpose.msra.mxu0 0.0
    %476 = vmatprep.subr.mxu0 0.0
    %477 = vmatpush2.xpose.msra.mxu0 0.0
    %478 = vmatprep.subr.mxu0 0.0
    %479 = vmatpush2.xpose.msra.mxu0 0.0
    %480 = vmatprep.subr.mxu0 0.0
    %481 = vmatpush2.xpose.msra.mxu0 0.0
    %482 = vmatprep.subr.mxu0 0.0
    %483 = vmatpush2.xpose.msra.mxu0 0.0
    %484 = vmatprep.subr.mxu0 0.0
    %485 = vmatpush2.xpose.msra.mxu0 0.0
    %486 = vmatprep.subr.mxu0 0.0
    %487 = vmatpush2.xpose.msra.mxu0 0.0
    %488 = vmatprep.subr.mxu0 0.0
    %489 = vmatpush2.xpose.msra.mxu0 0.0
    %490 = vmatprep.subr.mxu0 0.0
    %491 = vmatpush2.xpose.msra.mxu0 0.0
    %492 = vmatprep.subr.mxu0 0.0
    %493 = vmatpush2.xpose.msra.mxu0 0.0
    %494 = vmatprep.subr.mxu0 0.0
    %495 = vmatpush2.xpose.msra.mxu0 0.0
    %496 = vmatprep.subr.mxu0 0.0
    %497 = vmatpush2.xpose.msra.mxu0 0.0
    %498 = vmatprep.subr.mxu0 0.0
    %499 = vmatpush2.xpose.msra.mxu0 0.0
    %500 = vmatprep.subr.mxu0 0.0
    %501 = vmatpush2.xpose.msra.mxu0 0.0
    %502 = vmatprep.subr.mxu0 0.0
    %503 = vmatpush2.xpose.msra.mxu0 0.0
    %504 = vmatprep.mubr.f32.mxu0 0.0
    %505 = vmatmul.mubr.f32.gmra.mxu0 %v436
    %v506 = vpop.f32.mrf.mxu0
    %v507 = vadd.f32 0.0, %v506
    %v508 = vpop.f32.mrf.mxu0
    %509 = vdwg.mxu0
    %v510 = vsel %vm105, %v507, -inf
    %511 = vmax.xlane.f32.xlu0 %v510
    %v512 = vpop.xlane.xlu0 %511
    %v513 = vsub.f32 %v507, %v512
    %v514 = vmul.f32 %v513, 1.442695
    %v515 = vpow.pop %v514
    %v516 = vsel %vm105, %v515, 0.0
    %517 = vadd.xlane.f32.xlu0 %v516
    %v518 = vpop.xlane.xlu0 %517
    %v519 = vrcp.pop %v518
    %v520 = vmul.f32 %v515, %v519
    %521 = vrot.lane.b32.xlu0 %v97, 48
    %v522 = vpop.permute.xlu0 %521
    %v525 = vsel %vm105, %v520, 0
    %527 = vmatprep.subr.mxu0 0.0
    %528 = vmatpush1.msra.mxu0 0.0
    %529 = vmatprep.subr.mxu0 0.0
    %530 = vmatpush1.msra.mxu0 0.0
    %531 = vmatprep.subr.mxu0 0.0
    %532 = vmatpush1.msra.mxu0 0.0
    %533 = vmatprep.subr.mxu0 0.0
    %534 = vmatpush1.msra.mxu0 0.0
    %535 = vmatprep.subr.mxu0 0.0
    %536 = vmatpush1.msra.mxu0 0.0
    %537 = vmatprep.subr.mxu0 0.0
    %538 = vmatpush1.msra.mxu0 0.0
    %539 = vmatprep.subr.mxu0 0.0
    %540 = vmatpush1.msra.mxu0 0.0
    %541 = vmatprep.subr.mxu0 0.0
    %542 = vmatpush1.msra.mxu0 0.0
    %543 = vmatprep.subr.mxu0 0.0
    %544 = vmatpush1.msra.mxu0 0.0
    %545 = vmatprep.subr.mxu0 0.0
    %546 = vmatpush1.msra.mxu0 0.0
    %547 = vmatprep.subr.mxu0 0.0
    %548 = vmatpush1.msra.mxu0 0.0
    %549 = vmatprep.subr.mxu0 0.0
    %550 = vmatpush1.msra.mxu0 0.0
    %551 = vmatprep.subr.mxu0 0.0
    %552 = vmatpush1.msra.mxu0 0.0
    %553 = vmatprep.subr.mxu0 0.0
    %554 = vmatpush1.msra.mxu0 0.0
    %555 = vmatprep.subr.mxu0 0.0
    %556 = vmatpush1.msra.mxu0 0.0
    %557 = vmatprep.subr.mxu0 0.0
    %558 = vmatpush1.msra.mxu0 %v522
    %559 = vmatprep.subr.mxu0 0.0
    %560 = vmatpush2.msra.mxu0 0.0
    %561 = vmatprep.subr.mxu0 0.0
    %562 = vmatpush2.msra.mxu0 0.0
    %563 = vmatprep.subr.mxu0 0.0
    %564 = vmatpush2.msra.mxu0 0.0
    %565 = vmatprep.subr.mxu0 0.0
    %566 = vmatpush2.msra.mxu0 0.0
    %567 = vmatprep.subr.mxu0 0.0
    %568 = vmatpush2.msra.mxu0 0.0
    %569 = vmatprep.subr.mxu0 0.0
    %570 = vmatpush2.msra.mxu0 0.0
    %571 = vmatprep.subr.mxu0 0.0
    %572 = vmatpush2.msra.mxu0 0.0
    %573 = vmatprep.subr.mxu0 0.0
    %574 = vmatpush2.msra.mxu0 0.0
    %575 = vmatprep.subr.mxu0 0.0
    %576 = vmatpush2.msra.mxu0 0.0
    %577 = vmatprep.subr.mxu0 0.0
    %578 = vmatpush2.msra.mxu0 0.0
    %579 = vmatprep.subr.mxu0 0.0
    %580 = vmatpush2.msra.mxu0 0.0
    %581 = vmatprep.subr.mxu0 0.0
    %582 = vmatpush2.msra.mxu0 0.0
    %583 = vmatprep.subr.mxu0 0.0
    %584 = vmatpush2.msra.mxu0 0.0
    %585 = vmatprep.subr.mxu0 0.0
    %586 = vmatpush2.msra.mxu0 0.0
    %587 = vmatprep.subr.mxu0 0.0
    %588 = vmatpush2.msra.mxu0 0.0
    %589 = vmatprep.subr.mxu0 0.0
    %590 = vmatpush2.msra.mxu0 0.0
    %591 = vmatprep.mubr.f32.mxu0 0.0
    %592 = vmatmul.mubr.f32.gmra.mxu0 %v525
    %v593 = vpop.f32.mrf.mxu0
    %v594 = vadd.f32 0.0, %v593
    %v595 = vpop.f32.mrf.mxu0
    %596 = vdwg.mxu0
    %597 = vrot.lane.b32.xlu0 %v97, 104
    %v598 = vpop.permute.xlu0 %597
    %599 = vrot.lane.b32.xlu0 %v97, 72
    %v600 = vpop.permute.xlu0 %599
    %v601 = vsel %vm105, %v598, 0
    %v603 = vsel %vm105, %v600, 0
    %605 = vmatprep.subr.mxu0 0.0
    %606 = vmatpush1.xpose.msra.mxu0 0.0
    %607 = vmatprep.subr.mxu0 0.0
    %608 = vmatpush1.xpose.msra.mxu0 0.0
    %609 = vmatprep.subr.mxu0 0.0
    %610 = vmatpush1.xpose.msra.mxu0 0.0
    %611 = vmatprep.subr.mxu0 0.0
    %612 = vmatpush1.xpose.msra.mxu0 0.0
    %613 = vmatprep.subr.mxu0 0.0
    %614 = vmatpush1.xpose.msra.mxu0 0.0
    %615 = vmatprep.subr.mxu0 0.0
    %616 = vmatpush1.xpose.msra.mxu0 0.0
    %617 = vmatprep.subr.mxu0 0.0
    %618 = vmatpush1.xpose.msra.mxu0 0.0
    %619 = vmatprep.subr.mxu0 0.0
    %620 = vmatpush1.xpose.msra.mxu0 0.0
    %621 = vmatprep.subr.mxu0 0.0
    %622 = vmatpush1.xpose.msra.mxu0 0.0
    %623 = vmatprep.subr.mxu0 0.0
    %624 = vmatpush1.xpose.msra.mxu0 0.0
    %625 = vmatprep.subr.mxu0 0.0
    %626 = vmatpush1.xpose.msra.mxu0 0.0
    %627 = vmatprep.subr.mxu0 0.0
    %628 = vmatpush1.xpose.msra.mxu0 0.0
    %629 = vmatprep.subr.mxu0 0.0
    %630 = vmatpush1.xpose.msra.mxu0 0.0
    %631 = vmatprep.subr.mxu0 0.0
    %632 = vmatpush1.xpose.msra.mxu0 0.0
    %633 = vmatprep.subr.mxu0 0.0
    %634 = vmatpush1.xpose.msra.mxu0 0.0
    %635 = vmatprep.subr.mxu0 0.0
    %636 = vmatpush1.xpose.msra.mxu0 %v603
    %637 = vmatprep.subr.mxu0 0.0
    %638 = vmatpush2.xpose.msra.mxu0 0.0
    %639 = vmatprep.subr.mxu0 0.0
    %640 = vmatpush2.xpose.msra.mxu0 0.0
    %641 = vmatprep.subr.mxu0 0.0
    %642 = vmatpush2.xpose.msra.mxu0 0.0
    %643 = vmatprep.subr.mxu0 0.0
    %644 = vmatpush2.xpose.msra.mxu0 0.0
    %645 = vmatprep.subr.mxu0 0.0
    %646 = vmatpush2.xpose.msra.mxu0 0.0
    %647 = vmatprep.subr.mxu0 0.0
    %648 = vmatpush2.xpose.msra.mxu0 0.0
    %649 = vmatprep.subr.mxu0 0.0
    %650 = vmatpush2.xpose.msra.mxu0 0.0
    %651 = vmatprep.subr.mxu0 0.0
    %652 = vmatpush2.xpose.msra.mxu0 0.0
    %653 = vmatprep.subr.mxu0 0.0
    %654 = vmatpush2.xpose.msra.mxu0 0.0
    %655 = vmatprep.subr.mxu0 0.0
    %656 = vmatpush2.xpose.msra.mxu0 0.0
    %657 = vmatprep.subr.mxu0 0.0
    %658 = vmatpush2.xpose.msra.mxu0 0.0
    %659 = vmatprep.subr.mxu0 0.0
    %660 = vmatpush2.xpose.msra.mxu0 0.0
    %661 = vmatprep.subr.mxu0 0.0
    %662 = vmatpush2.xpose.msra.mxu0 0.0
    %663 = vmatprep.subr.mxu0 0.0
    %664 = vmatpush2.xpose.msra.mxu0 0.0
    %665 = vmatprep.subr.mxu0 0.0
    %666 = vmatpush2.xpose.msra.mxu0 0.0
    %667 = vmatprep.subr.mxu0 0.0
    %668 = vmatpush2.xpose.msra.mxu0 0.0
    %669 = vmatprep.mubr.f32.mxu0 0.0
    %670 = vmatmul.mubr.f32.gmra.mxu0 %v601
    %v671 = vpop.f32.mrf.mxu0
    %v672 = vadd.f32 0.0, %v671
    %v673 = vpop.f32.mrf.mxu0
    %674 = vdwg.mxu0
    %v675 = vsel %vm105, %v672, -inf
    %676 = vmax.xlane.f32.xlu0 %v675
    %v677 = vpop.xlane.xlu0 %676
    %v678 = vsub.f32 %v672, %v677
    %v679 = vmul.f32 %v678, 1.442695
    %v680 = vpow.pop %v679
    %v681 = vsel %vm105, %v680, 0.0
    %682 = vadd.xlane.f32.xlu0 %v681
    %v683 = vpop.xlane.xlu0 %682
    %v684 = vrcp.pop %v683
    %v685 = vmul.f32 %v680, %v684
    %686 = vrot.lane.b32.xlu0 %v97, 40
    %v687 = vpop.permute.xlu0 %686
    %v690 = vsel %vm105, %v685, 0
    %692 = vmatprep.subr.mxu0 0.0
    %693 = vmatpush1.msra.mxu0 0.0
    %694 = vmatprep.subr.mxu0 0.0
    %695 = vmatpush1.msra.mxu0 0.0
    %696 = vmatprep.subr.mxu0 0.0
    %697 = vmatpush1.msra.mxu0 0.0
    %698 = vmatprep.subr.mxu0 0.0
    %699 = vmatpush1.msra.mxu0 0.0
    %700 = vmatprep.subr.mxu0 0.0
    %701 = vmatpush1.msra.mxu0 0.0
    %702 = vmatprep.subr.mxu0 0.0
    %703 = vmatpush1.msra.mxu0 0.0
    %704 = vmatprep.subr.mxu0 0.0
    %705 = vmatpush1.msra.mxu0 0.0
    %706 = vmatprep.subr.mxu0 0.0
    %707 = vmatpush1.msra.mxu0 0.0
    %708 = vmatprep.subr.mxu0 0.0
    %709 = vmatpush1.msra.mxu0 0.0
    %710 = vmatprep.subr.mxu0 0.0
    %711 = vmatpush1.msra.mxu0 0.0
    %712 = vmatprep.subr.mxu0 0.0
    %713 = vmatpush1.msra.mxu0 0.0
    %714 = vmatprep.subr.mxu0 0.0
    %715 = vmatpush1.msra.mxu0 0.0
    %716 = vmatprep.subr.mxu0 0.0
    %717 = vmatpush1.msra.mxu0 0.0
    %718 = vmatprep.subr.mxu0 0.0
    %719 = vmatpush1.msra.mxu0 0.0
    %720 = vmatprep.subr.mxu0 0.0
    %721 = vmatpush1.msra.mxu0 0.0
    %722 = vmatprep.subr.mxu0 0.0
    %723 = vmatpush1.msra.mxu0 %v687
    %724 = vmatprep.subr.mxu0 0.0
    %725 = vmatpush2.msra.mxu0 0.0
    %726 = vmatprep.subr.mxu0 0.0
    %727 = vmatpush2.msra.mxu0 0.0
    %728 = vmatprep.subr.mxu0 0.0
    %729 = vmatpush2.msra.mxu0 0.0
    %730 = vmatprep.subr.mxu0 0.0
    %731 = vmatpush2.msra.mxu0 0.0
    %732 = vmatprep.subr.mxu0 0.0
    %733 = vmatpush2.msra.mxu0 0.0
    %734 = vmatprep.subr.mxu0 0.0
    %735 = vmatpush2.msra.mxu0 0.0
    %736 = vmatprep.subr.mxu0 0.0
    %737 = vmatpush2.msra.mxu0 0.0
    %738 = vmatprep.subr.mxu0 0.0
    %739 = vmatpush2.msra.mxu0 0.0
    %740 = vmatprep.subr.mxu0 0.0
    %741 = vmatpush2.msra.mxu0 0.0
    %742 = vmatprep.subr.mxu0 0.0
    %743 = vmatpush2.msra.mxu0 0.0
    %744 = vmatprep.subr.mxu0 0.0
    %745 = vmatpush2.msra.mxu0 0.0
    %746 = vmatprep.subr.mxu0 0.0
    %747 = vmatpush2.msra.mxu0 0.0
    %748 = vmatprep.subr.mxu0 0.0
    %749 = vmatpush2.msra.mxu0 0.0
    %750 = vmatprep.subr.mxu0 0.0
    %751 = vmatpush2.msra.mxu0 0.0
    %752 = vmatprep.subr.mxu0 0.0
    %753 = vmatpush2.msra.mxu0 0.0
    %754 = vmatprep.subr.mxu0 0.0
    %755 = vmatpush2.msra.mxu0 0.0
    %756 = vmatprep.mubr.f32.mxu0 0.0
    %757 = vmatmul.mubr.f32.gmra.mxu0 %v690
    %v758 = vpop.f32.mrf.mxu0
    %v759 = vadd.f32 0.0, %v758
    %v760 = vpop.f32.mrf.mxu0
    %761 = vdwg.mxu0
    %763 = vrot.lane.b32.xlu0 %v429, 8
    %v764 = vpop.permute.xlu0 %763
    %767 = vrot.lane.b32.xlu0 %v594, 16
    %v768 = vpop.permute.xlu0 %767
    %771 = vrot.lane.b32.xlu0 %v759, 24
    %v772 = vpop.permute.xlu0 %771
    %v774 = vsel %vm105, %v264, %v764
    %vm775 = vcmask 130048
    %v776 = vsel %vm775, %v774, %v768
    %vm777 = vcmask 195584
    %v778 = vsel %vm777, %v776, %v772
    %v779 = vpack.c.bf16 %v778, %v778
    %v780 = vld [vmem:[%s2] sm:$0xf]
    %v781 = vld [vmem:[%s2 + $0x4] sm:$0xf]
    %v782 = vld [vmem:[%s2 + $0x8] sm:$0xf]
    %v783 = vld [vmem:[%s2 + $0xc] sm:$0xf]
    %v784 = vlaneseq
    %v785 = vshrl.u32 %v784, 7
    %v786 = vsub.s32 1, %v785
    %v787 = vrot.slane %v28, %v786
    %v792 = vunpack.c.l.b16 %v780
    %v793 = vunpack.c.l.b16 %v781
    %v794 = vunpack.c.l.b16 %v782
    %v795 = vunpack.c.l.b16 %v783
    %v796 = vpack.c.b16 %v793, %v792
    %v797 = vpack.c.b16 %v795, %v794
    %v801 = vsel %vm58, %v779, 0
    %803 = vmatprep.subr.bf16.mxu0 0
    %804 = vmatpush1.bf16.msra.mxu0 0
    %805 = vmatprep.subr.bf16.mxu0 0
    %806 = vmatpush1.bf16.msra.mxu0 0
    %807 = vmatprep.subr.bf16.mxu0 0
    %808 = vmatpush1.bf16.msra.mxu0 0
    %809 = vmatprep.subr.bf16.mxu0 0
    %810 = vmatpush1.bf16.msra.mxu0 0
    %811 = vmatprep.subr.bf16.mxu0 0
    %812 = vmatpush1.bf16.msra.mxu0 0
    %813 = vmatprep.subr.bf16.mxu0 0
    %814 = vmatpush1.bf16.msra.mxu0 0
    %815 = vmatprep.subr.bf16.mxu0 0
    %816 = vmatpush1.bf16.msra.mxu0 %v797
    %817 = vmatprep.subr.bf16.mxu0 0
    %818 = vmatpush1.bf16.msra.mxu0 %v796
    %819 = vmatprep.subr.bf16.mxu0 0
    %820 = vmatpush2.bf16.msra.mxu0 0
    %821 = vmatprep.subr.bf16.mxu0 0
    %822 = vmatpush2.bf16.msra.mxu0 0
    %823 = vmatprep.subr.bf16.mxu0 0
    %824 = vmatpush2.bf16.msra.mxu0 0
    %825 = vmatprep.subr.bf16.mxu0 0
    %826 = vmatpush2.bf16.msra.mxu0 0
    %827 = vmatprep.subr.bf16.mxu0 0
    %828 = vmatpush2.bf16.msra.mxu0 0
    %829 = vmatprep.subr.bf16.mxu0 0
    %830 = vmatpush2.bf16.msra.mxu0 0
    %831 = vmatprep.subr.bf16.mxu0 0
    %832 = vmatpush2.bf16.msra.mxu0 0
    %833 = vmatprep.subr.bf16.mxu0 0
    %834 = vmatpush2.bf16.msra.mxu0 0
    %835 = vmatprep.mubr.bf16.mxu0 0
    %836 = vmatmul.mubr.bf16.gmra.mxu0 %v801
    %v837 = vpop.f32.mrf.mxu0
    %v838 = vadd.f32 %v787, %v837
    %v839 = vpop.f32.mrf.mxu0
    %v840 = vpop.f32.mrf.mxu0
    %v841 = vpop.f32.mrf.mxu0
    %842 = vdwg.mxu0
    %v843 = vadd.f32 %v36, %v838
    %v844 = vsel %vm58, %v843, 0.0
    %845 = vadd.xlane.f32.xlu0 %v844
    %v846 = vpop.xlane.xlu0 %845
    %v847 = vrcp.pop 32.0
    %v848 = vmul.f32 %v846, %v847
    %v849 = vsub.f32 %v843, %v848
    %v850 = vmul.f32 %v849, %v849
    %v851 = vsel %vm58, %v850, 0.0
    %852 = vadd.xlane.f32.xlu0 %v851
    %v853 = vpop.xlane.xlu0 %852
    %v854 = vmul.f32 %v853, %v847
    %v855 = vadd.f32 %v854, 1e-05
    %v856 = vrsqrt.pop %v855
    %v857 = vmul.f32 %v849, %v856
    %v858 = vlaneseq
    %v859 = vshrl.u32 %v858, 7
    %v860 = vsub.s32 2, %v859
    %v861 = vrot.slane %v28, %v860
    %v862 = vmul.f32 %v857, %v861
    %v863 = vlaneseq
    %v864 = vshrl.u32 %v863, 7
    %v865 = vsub.s32 3, %v864
    %v866 = vrot.slane %v28, %v865
    %v867 = vadd.f32 %v862, %v866
    %v868 = vpack.c.bf16 %v867, %v867
    %v869 = vld [vmem:[%s3] sm:$0xf]
    %v870 = vld [vmem:[%s3 + $0x4] sm:$0xf]
    %v871 = vld [vmem:[%s3 + $0x8] sm:$0xf]
    %v872 = vld [vmem:[%s3 + $0xc] sm:$0xf]
    %v873 = vlaneseq
    %v874 = vshrl.u32 %v873, 7
    %v875 = vsub.s32 4, %v874
    %v876 = vrot.slane %v28, %v875
    %v881 = vunpack.c.l.b16 %v869
    %v882 = vunpack.c.l.b16 %v870
    %v883 = vunpack.c.l.b16 %v871
    %v884 = vunpack.c.l.b16 %v872
    %v885 = vpack.c.b16 %v882, %v881
    %v886 = vpack.c.b16 %v884, %v883
    %v890 = vsel %vm58, %v868, 0
    %892 = vmatprep.subr.bf16.mxu0 0
    %893 = vmatpush1.bf16.msra.mxu0 0
    %894 = vmatprep.subr.bf16.mxu0 0
    %895 = vmatpush1.bf16.msra.mxu0 0
    %896 = vmatprep.subr.bf16.mxu0 0
    %897 = vmatpush1.bf16.msra.mxu0 0
    %898 = vmatprep.subr.bf16.mxu0 0
    %899 = vmatpush1.bf16.msra.mxu0 0
    %900 = vmatprep.subr.bf16.mxu0 0
    %901 = vmatpush1.bf16.msra.mxu0 0
    %902 = vmatprep.subr.bf16.mxu0 0
    %903 = vmatpush1.bf16.msra.mxu0 0
    %904 = vmatprep.subr.bf16.mxu0 0
    %905 = vmatpush1.bf16.msra.mxu0 %v886
    %906 = vmatprep.subr.bf16.mxu0 0
    %907 = vmatpush1.bf16.msra.mxu0 %v885
    %908 = vmatprep.subr.bf16.mxu0 0
    %909 = vmatpush2.bf16.msra.mxu0 0
    %910 = vmatprep.subr.bf16.mxu0 0
    %911 = vmatpush2.bf16.msra.mxu0 0
    %912 = vmatprep.subr.bf16.mxu0 0
    %913 = vmatpush2.bf16.msra.mxu0 0
    %914 = vmatprep.subr.bf16.mxu0 0
    %915 = vmatpush2.bf16.msra.mxu0 0
    %916 = vmatprep.subr.bf16.mxu0 0
    %917 = vmatpush2.bf16.msra.mxu0 0
    %918 = vmatprep.subr.bf16.mxu0 0
    %919 = vmatpush2.bf16.msra.mxu0 0
    %920 = vmatprep.subr.bf16.mxu0 0
    %921 = vmatpush2.bf16.msra.mxu0 0
    %922 = vmatprep.subr.bf16.mxu0 0
    %923 = vmatpush2.bf16.msra.mxu0 0
    %924 = vmatprep.mubr.bf16.mxu0 0
    %925 = vmatmul.mubr.bf16.gmra.mxu0 %v890
    %v926 = vpop.f32.mrf.mxu0
    %v927 = vadd.f32 %v876, %v926
    %v928 = vpop.f32.mrf.mxu0
    %v929 = vpop.f32.mrf.mxu0
    %v930 = vpop.f32.mrf.mxu0
    %931 = vdwg.mxu0
    %v932 = vmax.f32 %v927, 0.0
    %v933 = vpack.c.bf16 %v932, %v932
    %v934 = vld [vmem:[%s4] sm:$0xf]
    %v935 = vld [vmem:[%s4 + $0x4] sm:$0xf]
    %v936 = vld [vmem:[%s4 + $0x8] sm:$0xf]
    %v937 = vld [vmem:[%s4 + $0xc] sm:$0xf]
    %v938 = vld [vmem:[%s4 + $0x10] sm:$0xf]
    %v939 = vld [vmem:[%s4 + $0x14] sm:$0xf]
    %v940 = vld [vmem:[%s4 + $0x18] sm:$0xf]
    %v941 = vld [vmem:[%s4 + $0x1c] sm:$0xf]
    %v942 = vld [vmem:[%s4 + $0x20] sm:$0xf]
    %v943 = vld [vmem:[%s4 + $0x24] sm:$0xf]
    %v944 = vld [vmem:[%s4 + $0x28] sm:$0xf]
    %v945 = vld [vmem:[%s4 + $0x2c] sm:$0xf]
    %v946 = vld [vmem:[%s4 + $0x30] sm:$0xf]
    %v947 = vld [vmem:[%s4 + $0x34] sm:$0xf]
    %v948 = vld [vmem:[%s4 + $0x38] sm:$0xf]
    %v949 = vld [vmem:[%s4 + $0x3c] sm:$0xf]
    %v950 = vlaneseq
    %v951 = vshrl.u32 %v950, 7
    %v952 = vsub.s32 5, %v951
    %v953 = vrot.slane %v28, %v952
    %v970 = vunpack.c.l.b16 %v934
    %v971 = vunpack.c.l.b16 %v935
    %v972 = vunpack.c.l.b16 %v936
    %v973 = vunpack.c.l.b16 %v937
    %v974 = vunpack.c.l.b16 %v938
    %v975 = vunpack.c.l.b16 %v939
    %v976 = vunpack.c.l.b16 %v940
    %v977 = vunpack.c.l.b16 %v941
    %v978 = vunpack.c.l.b16 %v942
    %v979 = vunpack.c.l.b16 %v943
    %v980 = vunpack.c.l.b16 %v944
    %v981 = vunpack.c.l.b16 %v945
    %v982 = vunpack.c.l.b16 %v946
    %v983 = vunpack.c.l.b16 %v947
    %v984 = vunpack.c.l.b16 %v948
    %v985 = vunpack.c.l.b16 %v949
    %v986 = vpack.c.b16 %v971, %v970
    %v987 = vpack.c.b16 %v973, %v972
    %v988 = vpack.c.b16 %v975, %v974
    %v989 = vpack.c.b16 %v977, %v976
    %v990 = vpack.c.b16 %v979, %v978
    %v991 = vpack.c.b16 %v981, %v980
    %v992 = vpack.c.b16 %v983, %v982
    %v993 = vpack.c.b16 %v985, %v984
    %1002 = vmatprep.subr.bf16.mxu0 0
    %1003 = vmatpush1.bf16.msra.mxu0 %v993
    %1004 = vmatprep.subr.bf16.mxu0 0
    %1005 = vmatpush1.bf16.msra.mxu0 %v992
    %1006 = vmatprep.subr.bf16.mxu0 0
    %1007 = vmatpush1.bf16.msra.mxu0 %v991
    %1008 = vmatprep.subr.bf16.mxu0 0
    %1009 = vmatpush1.bf16.msra.mxu0 %v990
    %1010 = vmatprep.subr.bf16.mxu0 0
    %1011 = vmatpush1.bf16.msra.mxu0 %v989
    %1012 = vmatprep.subr.bf16.mxu0 0
    %1013 = vmatpush1.bf16.msra.mxu0 %v988
    %1014 = vmatprep.subr.bf16.mxu0 0
    %1015 = vmatpush1.bf16.msra.mxu0 %v987
    %1016 = vmatprep.subr.bf16.mxu0 0
    %1017 = vmatpush1.bf16.msra.mxu0 %v986
    %1018 = vmatprep.subr.bf16.mxu0 0
    %1019 = vmatpush2.bf16.msra.mxu0 0
    %1020 = vmatprep.subr.bf16.mxu0 0
    %1021 = vmatpush2.bf16.msra.mxu0 0
    %1022 = vmatprep.subr.bf16.mxu0 0
    %1023 = vmatpush2.bf16.msra.mxu0 0
    %1024 = vmatprep.subr.bf16.mxu0 0
    %1025 = vmatpush2.bf16.msra.mxu0 0
    %1026 = vmatprep.subr.bf16.mxu0 0
    %1027 = vmatpush2.bf16.msra.mxu0 0
    %1028 = vmatprep.subr.bf16.mxu0 0
    %1029 = vmatpush2.bf16.msra.mxu0 0
    %1030 = vmatprep.subr.bf16.mxu0 0
    %1031 = vmatpush2.bf16.msra.mxu0 0
    %1032 = vmatprep.subr.bf16.mxu0 0
    %1033 = vmatpush2.bf16.msra.mxu0 0
    %1034 = vmatprep.mubr.bf16.mxu0 0
    %1035 = vmatmul.mubr.bf16.gmra.mxu0 %v933
    %v1036 = vpop.f32.mrf.mxu0
    %v1037 = vadd.f32 %v953, %v1036
    %v1038 = vpop.f32.mrf.mxu0
    %v1039 = vpop.f32.mrf.mxu0
    %v1040 = vpop.f32.mrf.mxu0
    %1041 = vdwg.mxu0
    %v1042 = vadd.f32 %v867, %v1037
    %v1043 = vsel %vm58, %v1042, 0.0
    %1044 = vadd.xlane.f32.xlu0 %v1043
    %v1045 = vpop.xlane.xlu0 %1044
    %v1046 = vmul.f32 %v1045, %v847
    %v1047 = vsub.f32 %v1042, %v1046
    %v1048 = vmul.f32 %v1047, %v1047
    %v1049 = vsel %vm58, %v1048, 0.0
    %1050 = vadd.xlane.f32.xlu0 %v1049
    %v1051 = vpop.xlane.xlu0 %1050
    %v1052 = vmul.f32 %v1051, %v847
    %v1053 = vadd.f32 %v1052, 1e-05
    %v1054 = vrsqrt.pop %v1053
    %v1055 = vmul.f32 %v1047, %v1054
    %v1056 = vlaneseq
    %v1057 = vshrl.u32 %v1056, 7
    %v1058 = vsub.s32 6, %v1057
    %v1059 = vrot.slane %v28, %v1058
    %v1060 = vmul.f32 %v1055, %v1059
    %v1061 = vlaneseq
    %v1062 = vshrl.u32 %v1061, 7
    %v1063 = vsub.s32 7, %v1062
    %v1064 = vrot.slane %v28, %v1063
    %v1065 = vadd.f32 %v1060, %v1064
    %v1066 = vpack.c.bf16 %v1065, %v1065
    %s1067 = scalar_lea.vmem %s1, 16
    %v1068 = vld [vmem:[%s1067] sm:$0xf]
    %v1069 = vld [vmem:[%s1067 + $0x4] sm:$0xf]
    %v1070 = vld [vmem:[%s1067 + $0x8] sm:$0xf]
    %v1071 = vld [vmem:[%s1067 + $0xc] sm:$0xf]
    %v1072 = vlaneseq
    %v1073 = vshrl.u32 %v1072, 7
    %v1074 = vsub.s32 0, %v1073
    %v1075 = vrot.slane %v29, %v1074
    %v1080 = vunpack.c.l.b16 %v1068
    %v1081 = vunpack.c.l.b16 %v1069
    %v1082 = vunpack.c.l.b16 %v1070
    %v1083 = vunpack.c.l.b16 %v1071
    %v1084 = vpack.c.b16 %v1081, %v1080
    %v1085 = vpack.c.b16 %v1083, %v1082
    %v1089 = vsel %vm58, %v1066, 0
    %1091 = vmatprep.subr.bf16.mxu0 0
    %1092 = vmatpush1.bf16.msra.mxu0 0
    %1093 = vmatprep.subr.bf16.mxu0 0
    %1094 = vmatpush1.bf16.msra.mxu0 0
    %1095 = vmatprep.subr.bf16.mxu0 0
    %1096 = vmatpush1.bf16.msra.mxu0 0
    %1097 = vmatprep.subr.bf16.mxu0 0
    %1098 = vmatpush1.bf16.msra.mxu0 0
    %1099 = vmatprep.subr.bf16.mxu0 0
    %1100 = vmatpush1.bf16.msra.mxu0 0
    %1101 = vmatprep.subr.bf16.mxu0 0
    %1102 = vmatpush1.bf16.msra.mxu0 0
    %1103 = vmatprep.subr.bf16.mxu0 0
    %1104 = vmatpush1.bf16.msra.mxu0 %v1085
    %1105 = vmatprep.subr.bf16.mxu0 0
    %1106 = vmatpush1.bf16.msra.mxu0 %v1084
    %1107 = vmatprep.subr.bf16.mxu0 0
    %1108 = vmatpush2.bf16.msra.mxu0 0
    %1109 = vmatprep.subr.bf16.mxu0 0
    %1110 = vmatpush2.bf16.msra.mxu0 0
    %1111 = vmatprep.subr.bf16.mxu0 0
    %1112 = vmatpush2.bf16.msra.mxu0 0
    %1113 = vmatprep.subr.bf16.mxu0 0
    %1114 = vmatpush2.bf16.msra.mxu0 0
    %1115 = vmatprep.subr.bf16.mxu0 0
    %1116 = vmatpush2.bf16.msra.mxu0 0
    %1117 = vmatprep.subr.bf16.mxu0 0
    %1118 = vmatpush2.bf16.msra.mxu0 0
    %1119 = vmatprep.subr.bf16.mxu0 0
    %1120 = vmatpush2.bf16.msra.mxu0 0
    %1121 = vmatprep.subr.bf16.mxu0 0
    %1122 = vmatpush2.bf16.msra.mxu0 0
    %1123 = vmatprep.mubr.bf16.mxu0 0
    %1124 = vmatmul.mubr.bf16.gmra.mxu0 %v1089
    %v1125 = vpop.f32.mrf.mxu0
    %v1126 = vadd.f32 %v1075, %v1125
    %v1127 = vpop.f32.mrf.mxu0
    %v1128 = vpop.f32.mrf.mxu0
    %v1129 = vpop.f32.mrf.mxu0
    %1130 = vdwg.mxu0
    %1132 = vrot.lane.b32.xlu0 %v1126, 96
    %v1133 = vpop.permute.xlu0 %1132
    %v1134 = vsel %vm105, %v1126, 0
    %v1136 = vsel %vm105, %v1133, 0
    %1138 = vmatprep.subr.mxu0 0.0
    %1139 = vmatpush1.xpose.msra.mxu0 0.0
    %1140 = vmatprep.subr.mxu0 0.0
    %1141 = vmatpush1.xpose.msra.mxu0 0.0
    %1142 = vmatprep.subr.mxu0 0.0
    %1143 = vmatpush1.xpose.msra.mxu0 0.0
    %1144 = vmatprep.subr.mxu0 0.0
    %1145 = vmatpush1.xpose.msra.mxu0 0.0
    %1146 = vmatprep.subr.mxu0 0.0
    %1147 = vmatpush1.xpose.msra.mxu0 0.0
    %1148 = vmatprep.subr.mxu0 0.0
    %1149 = vmatpush1.xpose.msra.mxu0 0.0
    %1150 = vmatprep.subr.mxu0 0.0
    %1151 = vmatpush1.xpose.msra.mxu0 0.0
    %1152 = vmatprep.subr.mxu0 0.0
    %1153 = vmatpush1.xpose.msra.mxu0 0.0
    %1154 = vmatprep.subr.mxu0 0.0
    %1155 = vmatpush1.xpose.msra.mxu0 0.0
    %1156 = vmatprep.subr.mxu0 0.0
    %1157 = vmatpush1.xpose.msra.mxu0 0.0
    %1158 = vmatprep.subr.mxu0 0.0
    %1159 = vmatpush1.xpose.msra.mxu0 0.0
    %1160 = vmatprep.subr.mxu0 0.0
    %1161 = vmatpush1.xpose.msra.mxu0 0.0
    %1162 = vmatprep.subr.mxu0 0.0
    %1163 = vmatpush1.xpose.msra.mxu0 0.0
    %1164 = vmatprep.subr.mxu0 0.0
    %1165 = vmatpush1.xpose.msra.mxu0 0.0
    %1166 = vmatprep.subr.mxu0 0.0
    %1167 = vmatpush1.xpose.msra.mxu0 0.0
    %1168 = vmatprep.subr.mxu0 0.0
    %1169 = vmatpush1.xpose.msra.mxu0 %v1136
    %1170 = vmatprep.subr.mxu0 0.0
    %1171 = vmatpush2.xpose.msra.mxu0 0.0
    %1172 = vmatprep.subr.mxu0 0.0
    %1173 = vmatpush2.xpose.msra.mxu0 0.0
    %1174 = vmatprep.subr.mxu0 0.0
    %1175 = vmatpush2.xpose.msra.mxu0 0.0
    %1176 = vmatprep.subr.mxu0 0.0
    %1177 = vmatpush2.xpose.msra.mxu0 0.0
    %1178 = vmatprep.subr.mxu0 0.0
    %1179 = vmatpush2.xpose.msra.mxu0 0.0
    %1180 = vmatprep.subr.mxu0 0.0
    %1181 = vmatpush2.xpose.msra.mxu0 0.0
    %1182 = vmatprep.subr.mxu0 0.0
    %1183 = vmatpush2.xpose.msra.mxu0 0.0
    %1184 = vmatprep.subr.mxu0 0.0
    %1185 = vmatpush2.xpose.msra.mxu0 0.0
    %1186 = vmatprep.subr.mxu0 0.0
    %1187 = vmatpush2.xpose.msra.mxu0 0.0
    %1188 = vmatprep.subr.mxu0 0.0
    %1189 = vmatpush2.xpose.msra.mxu0 0.0
    %1190 = vmatprep.subr.mxu0 0.0
    %1191 = vmatpush2.xpose.msra.mxu0 0.0
    %1192 = vmatprep.subr.mxu0 0.0
    %1193 = vmatpush2.xpose.msra.mxu0 0.0
    %1194 = vmatprep.subr.mxu0 0.0
    %1195 = vmatpush2.xpose.msra.mxu0 0.0
    %1196 = vmatprep.subr.mxu0 0.0
    %1197 = vmatpush2.xpose.msra.mxu0 0.0
    %1198 = vmatprep.subr.mxu0 0.0
    %1199 = vmatpush2.xpose.msra.mxu0 0.0
    %1200 = vmatprep.subr.mxu0 0.0
    %1201 = vmatpush2.xpose.msra.mxu0 0.0
    %1202 = vmatprep.mubr.f32.mxu0 0.0
    %1203 = vmatmul.mubr.f32.gmra.mxu0 %v1134
    %v1204 = vpop.f32.mrf.mxu0
    %v1205 = vadd.f32 0.0, %v1204
    %v1206 = vpop.f32.mrf.mxu0
    %1207 = vdwg.mxu0
    %v1208 = vsel %vm105, %v1205, -inf
    %1209 = vmax.xlane.f32.xlu0 %v1208
    %v1210 = vpop.xlane.xlu0 %1209
    %v1211 = vsub.f32 %v1205, %v1210
    %v1212 = vmul.f32 %v1211, 1.442695
    %v1213 = vpow.pop %v1212
    %v1214 = vsel %vm105, %v1213, 0.0
    %1215 = vadd.xlane.f32.xlu0 %v1214
    %v1216 = vpop.xlane.xlu0 %1215
    %v1217 = vrcp.pop %v1216
    %v1218 = vmul.f32 %v1213, %v1217
    %1219 = vrot.lane.b32.xlu0 %v1126, 64
    %v1220 = vpop.permute.xlu0 %1219
    %v1223 = vsel %vm105, %v1218, 0
    %1225 = vmatprep.subr.mxu0 0.0
    %1226 = vmatpush1.msra.mxu0 0.0
    %1227 = vmatprep.subr.mxu0 0.0
    %1228 = vmatpush1.msra.mxu0 0.0
    %1229 = vmatprep.subr.mxu0 0.0
    %1230 = vmatpush1.msra.mxu0 0.0
    %1231 = vmatprep.subr.mxu0 0.0
    %1232 = vmatpush1.msra.mxu0 0.0
    %1233 = vmatprep.subr.mxu0 0.0
    %1234 = vmatpush1.msra.mxu0 0.0
    %1235 = vmatprep.subr.mxu0 0.0
    %1236 = vmatpush1.msra.mxu0 0.0
    %1237 = vmatprep.subr.mxu0 0.0
    %1238 = vmatpush1.msra.mxu0 0.0
    %1239 = vmatprep.subr.mxu0 0.0
    %1240 = vmatpush1.msra.mxu0 0.0
    %1241 = vmatprep.subr.mxu0 0.0
    %1242 = vmatpush1.msra.mxu0 0.0
    %1243 = vmatprep.subr.mxu0 0.0
    %1244 = vmatpush1.msra.mxu0 0.0
    %1245 = vmatprep.subr.mxu0 0.0
    %1246 = vmatpush1.msra.mxu0 0.0
    %1247 = vmatprep.subr.mxu0 0.0
    %1248 = vmatpush1.msra.mxu0 0.0
    %1249 = vmatprep.subr.mxu0 0.0
    %1250 = vmatpush1.msra.mxu0 0.0
    %1251 = vmatprep.subr.mxu0 0.0
    %1252 = vmatpush1.msra.mxu0 0.0
    %1253 = vmatprep.subr.mxu0 0.0
    %1254 = vmatpush1.msra.mxu0 0.0
    %1255 = vmatprep.subr.mxu0 0.0
    %1256 = vmatpush1.msra.mxu0 %v1220
    %1257 = vmatprep.subr.mxu0 0.0
    %1258 = vmatpush2.msra.mxu0 0.0
    %1259 = vmatprep.subr.mxu0 0.0
    %1260 = vmatpush2.msra.mxu0 0.0
    %1261 = vmatprep.subr.mxu0 0.0
    %1262 = vmatpush2.msra.mxu0 0.0
    %1263 = vmatprep.subr.mxu0 0.0
    %1264 = vmatpush2.msra.mxu0 0.0
    %1265 = vmatprep.subr.mxu0 0.0
    %1266 = vmatpush2.msra.mxu0 0.0
    %1267 = vmatprep.subr.mxu0 0.0
    %1268 = vmatpush2.msra.mxu0 0.0
    %1269 = vmatprep.subr.mxu0 0.0
    %1270 = vmatpush2.msra.mxu0 0.0
    %1271 = vmatprep.subr.mxu0 0.0
    %1272 = vmatpush2.msra.mxu0 0.0
    %1273 = vmatprep.subr.mxu0 0.0
    %1274 = vmatpush2.msra.mxu0 0.0
    %1275 = vmatprep.subr.mxu0 0.0
    %1276 = vmatpush2.msra.mxu0 0.0
    %1277 = vmatprep.subr.mxu0 0.0
    %1278 = vmatpush2.msra.mxu0 0.0
    %1279 = vmatprep.subr.mxu0 0.0
    %1280 = vmatpush2.msra.mxu0 0.0
    %1281 = vmatprep.subr.mxu0 0.0
    %1282 = vmatpush2.msra.mxu0 0.0
    %1283 = vmatprep.subr.mxu0 0.0
    %1284 = vmatpush2.msra.mxu0 0.0
    %1285 = vmatprep.subr.mxu0 0.0
    %1286 = vmatpush2.msra.mxu0 0.0
    %1287 = vmatprep.subr.mxu0 0.0
    %1288 = vmatpush2.msra.mxu0 0.0
    %1289 = vmatprep.mubr.f32.mxu0 0.0
    %1290 = vmatmul.mubr.f32.gmra.mxu0 %v1223
    %v1291 = vpop.f32.mrf.mxu0
    %v1292 = vadd.f32 0.0, %v1291
    %v1293 = vpop.f32.mrf.mxu0
    %1294 = vdwg.mxu0
    %1295 = vrot.lane.b32.xlu0 %v1126, 120
    %v1296 = vpop.permute.xlu0 %1295
    %1297 = vrot.lane.b32.xlu0 %v1126, 88
    %v1298 = vpop.permute.xlu0 %1297
    %v1299 = vsel %vm105, %v1296, 0
    %v1301 = vsel %vm105, %v1298, 0
    %1303 = vmatprep.subr.mxu0 0.0
    %1304 = vmatpush1.xpose.msra.mxu0 0.0
    %1305 = vmatprep.subr.mxu0 0.0
    %1306 = vmatpush1.xpose.msra.mxu0 0.0
    %1307 = vmatprep.subr.mxu0 0.0
    %1308 = vmatpush1.xpose.msra.mxu0 0.0
    %1309 = vmatprep.subr.mxu0 0.0
    %1310 = vmatpush1.xpose.msra.mxu0 0.0
    %1311 = vmatprep.subr.mxu0 0.0
    %1312 = vmatpush1.xpose.msra.mxu0 0.0
    %1313 = vmatprep.subr.mxu0 0.0
    %1314 = vmatpush1.xpose.msra.mxu0 0.0
    %1315 = vmatprep.subr.mxu0 0.0
    %1316 = vmatpush1.xpose.msra.mxu0 0.0
    %1317 = vmatprep.subr.mxu0 0.0
    %1318 = vmatpush1.xpose.msra.mxu0 0.0
    %1319 = vmatprep.subr.mxu0 0.0
    %1320 = vmatpush1.xpose.msra.mxu0 0.0
    %1321 = vmatprep.subr.mxu0 0.0
    %1322 = vmatpush1.xpose.msra.mxu0 0.0
    %1323 = vmatprep.subr.mxu0 0.0
    %1324 = vmatpush1.xpose.msra.mxu0 0.0
    %1325 = vmatprep.subr.mxu0 0.0
    %1326 = vmatpush1.xpose.msra.mxu0 0.0
    %1327 = vmatprep.subr.mxu0 0.0
    %1328 = vmatpush1.xpose.msra.mxu0 0.0
    %1329 = vmatprep.subr.mxu0 0.0
    %1330 = vmatpush1.xpose.msra.mxu0 0.0
    %1331 = vmatprep.subr.mxu0 0.0
    %1332 = vmatpush1.xpose.msra.mxu0 0.0
    %1333 = vmatprep.subr.mxu0 0.0
    %1334 = vmatpush1.xpose.msra.mxu0 %v1301
    %1335 = vmatprep.subr.mxu0 0.0
    %1336 = vmatpush2.xpose.msra.mxu0 0.0
    %1337 = vmatprep.subr.mxu0 0.0
    %1338 = vmatpush2.xpose.msra.mxu0 0.0
    %1339 = vmatprep.subr.mxu0 0.0
    %1340 = vmatpush2.xpose.msra.mxu0 0.0
    %1341 = vmatprep.subr.mxu0 0.0
    %1342 = vmatpush2.xpose.msra.mxu0 0.0
    %1343 = vmatprep.subr.mxu0 0.0
    %1344 = vmatpush2.xpose.msra.mxu0 0.0
    %1345 = vmatprep.subr.mxu0 0.0
    %1346 = vmatpush2.xpose.msra.mxu0 0.0
    %1347 = vmatprep.subr.mxu0 0.0
    %1348 = vmatpush2.xpose.msra.mxu0 0.0
    %1349 = vmatprep.subr.mxu0 0.0
    %1350 = vmatpush2.xpose.msra.mxu0 0.0
    %1351 = vmatprep.subr.mxu0 0.0
    %1352 = vmatpush2.xpose.msra.mxu0 0.0
    %1353 = vmatprep.subr.mxu0 0.0
    %1354 = vmatpush2.xpose.msra.mxu0 0.0
    %1355 = vmatprep.subr.mxu0 0.0
    %1356 = vmatpush2.xpose.msra.mxu0 0.0
    %1357 = vmatprep.subr.mxu0 0.0
    %1358 = vmatpush2.xpose.msra.mxu0 0.0
    %1359 = vmatprep.subr.mxu0 0.0
    %1360 = vmatpush2.xpose.msra.mxu0 0.0
    %1361 = vmatprep.subr.mxu0 0.0
    %1362 = vmatpush2.xpose.msra.mxu0 0.0
    %1363 = vmatprep.subr.mxu0 0.0
    %1364 = vmatpush2.xpose.msra.mxu0 0.0
    %1365 = vmatprep.subr.mxu0 0.0
    %1366 = vmatpush2.xpose.msra.mxu0 0.0
    %1367 = vmatprep.mubr.f32.mxu0 0.0
    %1368 = vmatmul.mubr.f32.gmra.mxu0 %v1299
    %v1369 = vpop.f32.mrf.mxu0
    %v1370 = vadd.f32 0.0, %v1369
    %v1371 = vpop.f32.mrf.mxu0
    %1372 = vdwg.mxu0
    %v1373 = vsel %vm105, %v1370, -inf
    %1374 = vmax.xlane.f32.xlu0 %v1373
    %v1375 = vpop.xlane.xlu0 %1374
    %v1376 = vsub.f32 %v1370, %v1375
    %v1377 = vmul.f32 %v1376, 1.442695
    %v1378 = vpow.pop %v1377
    %v1379 = vsel %vm105, %v1378, 0.0
    %1380 = vadd.xlane.f32.xlu0 %v1379
    %v1381 = vpop.xlane.xlu0 %1380
    %v1382 = vrcp.pop %v1381
    %v1383 = vmul.f32 %v1378, %v1382
    %1384 = vrot.lane.b32.xlu0 %v1126, 56
    %v1385 = vpop.permute.xlu0 %1384
    %v1388 = vsel %vm105, %v1383, 0
    %1390 = vmatprep.subr.mxu0 0.0
    %1391 = vmatpush1.msra.mxu0 0.0
    %1392 = vmatprep.subr.mxu0 0.0
    %1393 = vmatpush1.msra.mxu0 0.0
    %1394 = vmatprep.subr.mxu0 0.0
    %1395 = vmatpush1.msra.mxu0 0.0
    %1396 = vmatprep.subr.mxu0 0.0
    %1397 = vmatpush1.msra.mxu0 0.0
    %1398 = vmatprep.subr.mxu0 0.0
    %1399 = vmatpush1.msra.mxu0 0.0
    %1400 = vmatprep.subr.mxu0 0.0
    %1401 = vmatpush1.msra.mxu0 0.0
    %1402 = vmatprep.subr.mxu0 0.0
    %1403 = vmatpush1.msra.mxu0 0.0
    %1404 = vmatprep.subr.mxu0 0.0
    %1405 = vmatpush1.msra.mxu0 0.0
    %1406 = vmatprep.subr.mxu0 0.0
    %1407 = vmatpush1.msra.mxu0 0.0
    %1408 = vmatprep.subr.mxu0 0.0
    %1409 = vmatpush1.msra.mxu0 0.0
    %1410 = vmatprep.subr.mxu0 0.0
    %1411 = vmatpush1.msra.mxu0 0.0
    %1412 = vmatprep.subr.mxu0 0.0
    %1413 = vmatpush1.msra.mxu0 0.0
    %1414 = vmatprep.subr.mxu0 0.0
    %1415 = vmatpush1.msra.mxu0 0.0
    %1416 = vmatprep.subr.mxu0 0.0
    %1417 = vmatpush1.msra.mxu0 0.0
    %1418 = vmatprep.subr.mxu0 0.0
    %1419 = vmatpush1.msra.mxu0 0.0
    %1420 = vmatprep.subr.mxu0 0.0
    %1421 = vmatpush1.msra.mxu0 %v1385
    %1422 = vmatprep.subr.mxu0 0.0
    %1423 = vmatpush2.msra.mxu0 0.0
    %1424 = vmatprep.subr.mxu0 0.0
    %1425 = vmatpush2.msra.mxu0 0.0
    %1426 = vmatprep.subr.mxu0 0.0
    %1427 = vmatpush2.msra.mxu0 0.0
    %1428 = vmatprep.subr.mxu0 0.0
    %1429 = vmatpush2.msra.mxu0 0.0
    %1430 = vmatprep.subr.mxu0 0.0
    %1431 = vmatpush2.msra.mxu0 0.0
    %1432 = vmatprep.subr.mxu0 0.0
    %1433 = vmatpush2.msra.mxu0 0.0
    %1434 = vmatprep.subr.mxu0 0.0
    %1435 = vmatpush2.msra.mxu0 0.0
    %1436 = vmatprep.subr.mxu0 0.0
    %1437 = vmatpush2.msra.mxu0 0.0
    %1438 = vmatprep.subr.mxu0 0.0
    %1439 = vmatpush2.msra.mxu0 0.0
    %1440 = vmatprep.subr.mxu0 0.0
    %1441 = vmatpush2.msra.mxu0 0.0
    %1442 = vmatprep.subr.mxu0 0.0
    %1443 = vmatpush2.msra.mxu0 0.0
    %1444 = vmatprep.subr.mxu0 0.0
    %1445 = vmatpush2.msra.mxu0 0.0
    %1446 = vmatprep.subr.mxu0 0.0
    %1447 = vmatpush2.msra.mxu0 0.0
    %1448 = vmatprep.subr.mxu0 0.0
    %1449 = vmatpush2.msra.mxu0 0.0
    %1450 = vmatprep.subr.mxu0 0.0
    %1451 = vmatpush2.msra.mxu0 0.0
    %1452 = vmatprep.subr.mxu0 0.0
    %1453 = vmatpush2.msra.mxu0 0.0
    %1454 = vmatprep.mubr.f32.mxu0 0.0
    %1455 = vmatmul.mubr.f32.gmra.mxu0 %v1388
    %v1456 = vpop.f32.mrf.mxu0
    %v1457 = vadd.f32 0.0, %v1456
    %v1458 = vpop.f32.mrf.mxu0
    %1459 = vdwg.mxu0
    %1460 = vrot.lane.b32.xlu0 %v1126, 112
    %v1461 = vpop.permute.xlu0 %1460
    %1462 = vrot.lane.b32.xlu0 %v1126, 80
    %v1463 = vpop.permute.xlu0 %1462
    %v1464 = vsel %vm105, %v1461, 0
    %v1466 = vsel %vm105, %v1463, 0
    %1468 = vmatprep.subr.mxu0 0.0
    %1469 = vmatpush1.xpose.msra.mxu0 0.0
    %1470 = vmatprep.subr.mxu0 0.0
    %1471 = vmatpush1.xpose.msra.mxu0 0.0
    %1472 = vmatprep.subr.mxu0 0.0
    %1473 = vmatpush1.xpose.msra.mxu0 0.0
    %1474 = vmatprep.subr.mxu0 0.0
    %1475 = vmatpush1.xpose.msra.mxu0 0.0
    %1476 = vmatprep.subr.mxu0 0.0
    %1477 = vmatpush1.xpose.msra.mxu0 0.0
    %1478 = vmatprep.subr.mxu0 0.0
    %1479 = vmatpush1.xpose.msra.mxu0 0.0
    %1480 = vmatprep.subr.mxu0 0.0
    %1481 = vmatpush1.xpose.msra.mxu0 0.0
    %1482 = vmatprep.subr.mxu0 0.0
    %1483 = vmatpush1.xpose.msra.mxu0 0.0
    %1484 = vmatprep.subr.mxu0 0.0
    %1485 = vmatpush1.xpose.msra.mxu0 0.0
    %1486 = vmatprep.subr.mxu0 0.0
    %1487 = vmatpush1.xpose.msra.mxu0 0.0
    %1488 = vmatprep.subr.mxu0 0.0
    %1489 = vmatpush1.xpose.msra.mxu0 0.0
    %1490 = vmatprep.subr.mxu0 0.0
    %1491 = vmatpush1.xpose.msra.mxu0 0.0
    %1492 = vmatprep.subr.mxu0 0.0
    %1493 = vmatpush1.xpose.msra.mxu0 0.0
    %1494 = vmatprep.subr.mxu0 0.0
    %1495 = vmatpush1.xpose.msra.mxu0 0.0
    %1496 = vmatprep.subr.mxu0 0.0
    %1497 = vmatpush1.xpose.msra.mxu0 0.0
    %1498 = vmatprep.subr.mxu0 0.0
    %1499 = vmatpush1.xpose.msra.mxu0 %v1466
    %1500 = vmatprep.subr.mxu0 0.0
    %1501 = vmatpush2.xpose.msra.mxu0 0.0
    %1502 = vmatprep.subr.mxu0 0.0
    %1503 = vmatpush2.xpose.msra.mxu0 0.0
    %1504 = vmatprep.subr.mxu0 0.0
    %1505 = vmatpush2.xpose.msra.mxu0 0.0
    %1506 = vmatprep.subr.mxu0 0.0
    %1507 = vmatpush2.xpose.msra.mxu0 0.0
    %1508 = vmatprep.subr.mxu0 0.0
    %1509 = vmatpush2.xpose.msra.mxu0 0.0
    %1510 = vmatprep.subr.mxu0 0.0
    %1511 = vmatpush2.xpose.msra.mxu0 0.0
    %1512 = vmatprep.subr.mxu0 0.0
    %1513 = vmatpush2.xpose.msra.mxu0 0.0
    %1514 = vmatprep.subr.mxu0 0.0
    %1515 = vmatpush2.xpose.msra.mxu0 0.0
    %1516 = vmatprep.subr.mxu0 0.0
    %1517 = vmatpush2.xpose.msra.mxu0 0.0
    %1518 = vmatprep.subr.mxu0 0.0
    %1519 = vmatpush2.xpose.msra.mxu0 0.0
    %1520 = vmatprep.subr.mxu0 0.0
    %1521 = vmatpush2.xpose.msra.mxu0 0.0
    %1522 = vmatprep.subr.mxu0 0.0
    %1523 = vmatpush2.xpose.msra.mxu0 0.0
    %1524 = vmatprep.subr.mxu0 0.0
    %1525 = vmatpush2.xpose.msra.mxu0 0.0
    %1526 = vmatprep.subr.mxu0 0.0
    %1527 = vmatpush2.xpose.msra.mxu0 0.0
    %1528 = vmatprep.subr.mxu0 0.0
    %1529 = vmatpush2.xpose.msra.mxu0 0.0
    %1530 = vmatprep.subr.mxu0 0.0
    %1531 = vmatpush2.xpose.msra.mxu0 0.0
    %1532 = vmatprep.mubr.f32.mxu0 0.0
    %1533 = vmatmul.mubr.f32.gmra.mxu0 %v1464
    %v1534 = vpop.f32.mrf.mxu0
    %v1535 = vadd.f32 0.0, %v1534
    %v1536 = vpop.f32.mrf.mxu0
    %1537 = vdwg.mxu0
    %v1538 = vsel %vm105, %v1535, -inf
    %1539 = vmax.xlane.f32.xlu0 %v1538
    %v1540 = vpop.xlane.xlu0 %1539
    %v1541 = vsub.f32 %v1535, %v1540
    %v1542 = vmul.f32 %v1541, 1.442695
    %v1543 = vpow.pop %v1542
    %v1544 = vsel %vm105, %v1543, 0.0
    %1545 = vadd.xlane.f32.xlu0 %v1544
    %v1546 = vpop.xlane.xlu0 %1545
    %v1547 = vrcp.pop %v1546
    %v1548 = vmul.f32 %v1543, %v1547
    %1549 = vrot.lane.b32.xlu0 %v1126, 48
    %v1550 = vpop.permute.xlu0 %1549
    %v1553 = vsel %vm105, %v1548, 0
    %1555 = vmatprep.subr.mxu0 0.0
    %1556 = vmatpush1.msra.mxu0 0.0
    %1557 = vmatprep.subr.mxu0 0.0
    %1558 = vmatpush1.msra.mxu0 0.0
    %1559 = vmatprep.subr.mxu0 0.0
    %1560 = vmatpush1.msra.mxu0 0.0
    %1561 = vmatprep.subr.mxu0 0.0
    %1562 = vmatpush1.msra.mxu0 0.0
    %1563 = vmatprep.subr.mxu0 0.0
    %1564 = vmatpush1.msra.mxu0 0.0
    %1565 = vmatprep.subr.mxu0 0.0
    %1566 = vmatpush1.msra.mxu0 0.0
    %1567 = vmatprep.subr.mxu0 0.0
    %1568 = vmatpush1.msra.mxu0 0.0
    %1569 = vmatprep.subr.mxu0 0.0
    %1570 = vmatpush1.msra.mxu0 0.0
    %1571 = vmatprep.subr.mxu0 0.0
    %1572 = vmatpush1.msra.mxu0 0.0
    %1573 = vmatprep.subr.mxu0 0.0
    %1574 = vmatpush1.msra.mxu0 0.0
    %1575 = vmatprep.subr.mxu0 0.0
    %1576 = vmatpush1.msra.mxu0 0.0
    %1577 = vmatprep.subr.mxu0 0.0
    %1578 = vmatpush1.msra.mxu0 0.0
    %1579 = vmatprep.subr.mxu0 0.0
    %1580 = vmatpush1.msra.mxu0 0.0
    %1581 = vmatprep.subr.mxu0 0.0
    %1582 = vmatpush1.msra.mxu0 0.0
    %1583 = vmatprep.subr.mxu0 0.0
    %1584 = vmatpush1.msra.mxu0 0.0
    %1585 = vmatprep.subr.mxu0 0.0
    %1586 = vmatpush1.msra.mxu0 %v1550
    %1587 = vmatprep.subr.mxu0 0.0
    %1588 = vmatpush2.msra.mxu0 0.0
    %1589 = vmatprep.subr.mxu0 0.0
    %1590 = vmatpush2.msra.mxu0 0.0
    %1591 = vmatprep.subr.mxu0 0.0
    %1592 = vmatpush2.msra.mxu0 0.0
    %1593 = vmatprep.subr.mxu0 0.0
    %1594 = vmatpush2.msra.mxu0 0.0
    %1595 = vmatprep.subr.mxu0 0.0
    %1596 = vmatpush2.msra.mxu0 0.0
    %1597 = vmatprep.subr.mxu0 0.0
    %1598 = vmatpush2.msra.mxu0 0.0
    %1599 = vmatprep.subr.mxu0 0.0
    %1600 = vmatpush2.msra.mxu0 0.0
    %1601 = vmatprep.subr.mxu0 0.0
    %1602 = vmatpush2.msra.mxu0 0.0
    %1603 = vmatprep.subr.mxu0 0.0
    %1604 = vmatpush2.msra.mxu0 0.0
    %1605 = vmatprep.subr.mxu0 0.0
    %1606 = vmatpush2.msra.mxu0 0.0
    %1607 = vmatprep.subr.mxu0 0.0
    %1608 = vmatpush2.msra.mxu0 0.0
    %1609 = vmatprep.subr.mxu0 0.0
    %1610 = vmatpush2.msra.mxu0 0.0
    %1611 = vmatprep.subr.mxu0 0.0
    %1612 = vmatpush2.msra.mxu0 0.0
    %1613 = vmatprep.subr.mxu0 0.0
    %1614 = vmatpush2.msra.mxu0 0.0
    %1615 = vmatprep.subr.mxu0 0.0
    %1616 = vmatpush2.msra.mxu0 0.0
    %1617 = vmatprep.subr.mxu0 0.0
    %1618 = vmatpush2.msra.mxu0 0.0
    %1619 = vmatprep.mubr.f32.mxu0 0.0
    %1620 = vmatmul.mubr.f32.gmra.mxu0 %v1553
    %v1621 = vpop.f32.mrf.mxu0
    %v1622 = vadd.f32 0.0, %v1621
    %v1623 = vpop.f32.mrf.mxu0
    %1624 = vdwg.mxu0
    %1625 = vrot.lane.b32.xlu0 %v1126, 104
    %v1626 = vpop.permute.xlu0 %1625
    %1627 = vrot.lane.b32.xlu0 %v1126, 72
    %v1628 = vpop.permute.xlu0 %1627
    %v1629 = vsel %vm105, %v1626, 0
    %v1631 = vsel %vm105, %v1628, 0
    %1633 = vmatprep.subr.mxu0 0.0
    %1634 = vmatpush1.xpose.msra.mxu0 0.0
    %1635 = vmatprep.subr.mxu0 0.0
    %1636 = vmatpush1.xpose.msra.mxu0 0.0
    %1637 = vmatprep.subr.mxu0 0.0
    %1638 = vmatpush1.xpose.msra.mxu0 0.0
    %1639 = vmatprep.subr.mxu0 0.0
    %1640 = vmatpush1.xpose.msra.mxu0 0.0
    %1641 = vmatprep.subr.mxu0 0.0
    %1642 = vmatpush1.xpose.msra.mxu0 0.0
    %1643 = vmatprep.subr.mxu0 0.0
    %1644 = vmatpush1.xpose.msra.mxu0 0.0
    %1645 = vmatprep.subr.mxu0 0.0
    %1646 = vmatpush1.xpose.msra.mxu0 0.0
    %1647 = vmatprep.subr.mxu0 0.0
    %1648 = vmatpush1.xpose.msra.mxu0 0.0
    %1649 = vmatprep.subr.mxu0 0.0
    %1650 = vmatpush1.xpose.msra.mxu0 0.0
    %1651 = vmatprep.subr.mxu0 0.0
    %1652 = vmatpush1.xpose.msra.mxu0 0.0
    %1653 = vmatprep.subr.mxu0 0.0
    %1654 = vmatpush1.xpose.msra.mxu0 0.0
    %1655 = vmatprep.subr.mxu0 0.0
    %1656 = vmatpush1.xpose.msra.mxu0 0.0
    %1657 = vmatprep.subr.mxu0 0.0
    %1658 = vmatpush1.xpose.msra.mxu0 0.0
    %1659 = vmatprep.subr.mxu0 0.0
    %1660 = vmatpush1.xpose.msra.mxu0 0.0
    %1661 = vmatprep.subr.mxu0 0.0
    %1662 = vmatpush1.xpose.msra.mxu0 0.0
    %1663 = vmatprep.subr.mxu0 0.0
    %1664 = vmatpush1.xpose.msra.mxu0 %v1631
    %1665 = vmatprep.subr.mxu0 0.0
    %1666 = vmatpush2.xpose.msra.mxu0 0.0
    %1667 = vmatprep.subr.mxu0 0.0
    %1668 = vmatpush2.xpose.msra.mxu0 0.0
    %1669 = vmatprep.subr.mxu0 0.0
    %1670 = vmatpush2.xpose.msra.mxu0 0.0
    %1671 = vmatprep.subr.mxu0 0.0
    %1672 = vmatpush2.xpose.msra.mxu0 0.0
    %1673 = vmatprep.subr.mxu0 0.0
    %1674 = vmatpush2.xpose.msra.mxu0 0.0
    %1675 = vmatprep.subr.mxu0 0.0
    %1676 = vmatpush2.xpose.msra.mxu0 0.0
    %1677 = vmatprep.subr.mxu0 0.0
    %1678 = vmatpush2.xpose.msra.mxu0 0.0
    %1679 = vmatprep.subr.mxu0 0.0
    %1680 = vmatpush2.xpose.msra.mxu0 0.0
    %1681 = vmatprep.subr.mxu0 0.0
    %1682 = vmatpush2.xpose.msra.mxu0 0.0
    %1683 = vmatprep.subr.mxu0 0.0
    %1684 = vmatpush2.xpose.msra.mxu0 0.0
    %1685 = vmatprep.subr.mxu0 0.0
    %1686 = vmatpush2.xpose.msra.mxu0 0.0
    %1687 = vmatprep.subr.mxu0 0.0
    %1688 = vmatpush2.xpose.msra.mxu0 0.0
    %1689 = vmatprep.subr.mxu0 0.0
    %1690 = vmatpush2.xpose.msra.mxu0 0.0
    %1691 = vmatprep.subr.mxu0 0.0
    %1692 = vmatpush2.xpose.msra.mxu0 0.0
    %1693 = vmatprep.subr.mxu0 0.0
    %1694 = vmatpush2.xpose.msra.mxu0 0.0
    %1695 = vmatprep.subr.mxu0 0.0
    %1696 = vmatpush2.xpose.msra.mxu0 0.0
    %1697 = vmatprep.mubr.f32.mxu0 0.0
    %1698 = vmatmul.mubr.f32.gmra.mxu0 %v1629
    %v1699 = vpop.f32.mrf.mxu0
    %v1700 = vadd.f32 0.0, %v1699
    %v1701 = vpop.f32.mrf.mxu0
    %1702 = vdwg.mxu0
    %v1703 = vsel %vm105, %v1700, -inf
    %1704 = vmax.xlane.f32.xlu0 %v1703
    %v1705 = vpop.xlane.xlu0 %1704
    %v1706 = vsub.f32 %v1700, %v1705
    %v1707 = vmul.f32 %v1706, 1.442695
    %v1708 = vpow.pop %v1707
    %v1709 = vsel %vm105, %v1708, 0.0
    %1710 = vadd.xlane.f32.xlu0 %v1709
    %v1711 = vpop.xlane.xlu0 %1710
    %v1712 = vrcp.pop %v1711
    %v1713 = vmul.f32 %v1708, %v1712
    %1714 = vrot.lane.b32.xlu0 %v1126, 40
    %v1715 = vpop.permute.xlu0 %1714
    %v1718 = vsel %vm105, %v1713, 0
    %1720 = vmatprep.subr.mxu0 0.0
    %1721 = vmatpush1.msra.mxu0 0.0
    %1722 = vmatprep.subr.mxu0 0.0
    %1723 = vmatpush1.msra.mxu0 0.0
    %1724 = vmatprep.subr.mxu0 0.0
    %1725 = vmatpush1.msra.mxu0 0.0
    %1726 = vmatprep.subr.mxu0 0.0
    %1727 = vmatpush1.msra.mxu0 0.0
    %1728 = vmatprep.subr.mxu0 0.0
    %1729 = vmatpush1.msra.mxu0 0.0
    %1730 = vmatprep.subr.mxu0 0.0
    %1731 = vmatpush1.msra.mxu0 0.0
    %1732 = vmatprep.subr.mxu0 0.0
    %1733 = vmatpush1.msra.mxu0 0.0
    %1734 = vmatprep.subr.mxu0 0.0
    %1735 = vmatpush1.msra.mxu0 0.0
    %1736 = vmatprep.subr.mxu0 0.0
    %1737 = vmatpush1.msra.mxu0 0.0
    %1738 = vmatprep.subr.mxu0 0.0
    %1739 = vmatpush1.msra.mxu0 0.0
    %1740 = vmatprep.subr.mxu0 0.0
    %1741 = vmatpush1.msra.mxu0 0.0
    %1742 = vmatprep.subr.mxu0 0.0
    %1743 = vmatpush1.msra.mxu0 0.0
    %1744 = vmatprep.subr.mxu0 0.0
    %1745 = vmatpush1.msra.mxu0 0.0
    %1746 = vmatprep.subr.mxu0 0.0
    %1747 = vmatpush1.msra.mxu0 0.0
    %1748 = vmatprep.subr.mxu0 0.0
    %1749 = vmatpush1.msra.mxu0 0.0
    %1750 = vmatprep.subr.mxu0 0.0
    %1751 = vmatpush1.msra.mxu0 %v1715
    %1752 = vmatprep.subr.mxu0 0.0
    %1753 = vmatpush2.msra.mxu0 0.0
    %1754 = vmatprep.subr.mxu0 0.0
    %1755 = vmatpush2.msra.mxu0 0.0
    %1756 = vmatprep.subr.mxu0 0.0
    %1757 = vmatpush2.msra.mxu0 0.0
    %1758 = vmatprep.subr.mxu0 0.0
    %1759 = vmatpush2.msra.mxu0 0.0
    %1760 = vmatprep.subr.mxu0 0.0
    %1761 = vmatpush2.msra.mxu0 0.0
    %1762 = vmatprep.subr.mxu0 0.0
    %1763 = vmatpush2.msra.mxu0 0.0
    %1764 = vmatprep.subr.mxu0 0.0
    %1765 = vmatpush2.msra.mxu0 0.0
    %1766 = vmatprep.subr.mxu0 0.0
    %1767 = vmatpush2.msra.mxu0 0.0
    %1768 = vmatprep.subr.mxu0 0.0
    %1769 = vmatpush2.msra.mxu0 0.0
    %1770 = vmatprep.subr.mxu0 0.0
    %1771 = vmatpush2.msra.mxu0 0.0
    %1772 = vmatprep.subr.mxu0 0.0
    %1773 = vmatpush2.msra.mxu0 0.0
    %1774 = vmatprep.subr.mxu0 0.0
    %1775 = vmatpush2.msra.mxu0 0.0
    %1776 = vmatprep.subr.mxu0 0.0
    %1777 = vmatpush2.msra.mxu0 0.0
    %1778 = vmatprep.subr.mxu0 0.0
    %1779 = vmatpush2.msra.mxu0 0.0
    %1780 = vmatprep.subr.mxu0 0.0
    %1781 = vmatpush2.msra.mxu0 0.0
    %1782 = vmatprep.subr.mxu0 0.0
    %1783 = vmatpush2.msra.mxu0 0.0
    %1784 = vmatprep.mubr.f32.mxu0 0.0
    %1785 = vmatmul.mubr.f32.gmra.mxu0 %v1718
    %v1786 = vpop.f32.mrf.mxu0
    %v1787 = vadd.f32 0.0, %v1786
    %v1788 = vpop.f32.mrf.mxu0
    %1789 = vdwg.mxu0
    %1791 = vrot.lane.b32.xlu0 %v1457, 8
    %v1792 = vpop.permute.xlu0 %1791
    %1795 = vrot.lane.b32.xlu0 %v1622, 16
    %v1796 = vpop.permute.xlu0 %1795
    %1799 = vrot.lane.b32.xlu0 %v1787, 24
    %v1800 = vpop.permute.xlu0 %1799
    %v1802 = vsel %vm105, %v1292, %v1792
    %v1803 = vsel %vm775, %v1802, %v1796
    %v1804 = vsel %vm777, %v1803, %v1800
    %v1805 = vpack.c.bf16 %v1804, %v1804
    %s1806 = scalar_lea.vmem %s2, 16
    %v1807 = vld [vmem:[%s1806] sm:$0xf]
    %v1808 = vld [vmem:[%s1806 + $0x4] sm:$0xf]
    %v1809 = vld [vmem:[%s1806 + $0x8] sm:$0xf]
    %v1810 = vld [vmem:[%s1806 + $0xc] sm:$0xf]
    %v1811 = vlaneseq
    %v1812 = vshrl.u32 %v1811, 7
    %v1813 = vsub.s32 1, %v1812
    %v1814 = vrot.slane %v29, %v1813
    %v1819 = vunpack.c.l.b16 %v1807
    %v1820 = vunpack.c.l.b16 %v1808
    %v1821 = vunpack.c.l.b16 %v1809
    %v1822 = vunpack.c.l.b16 %v1810
    %v1823 = vpack.c.b16 %v1820, %v1819
    %v1824 = vpack.c.b16 %v1822, %v1821
    %v1828 = vsel %vm58, %v1805, 0
    %1830 = vmatprep.subr.bf16.mxu0 0
    %1831 = vmatpush1.bf16.msra.mxu0 0
    %1832 = vmatprep.subr.bf16.mxu0 0
    %1833 = vmatpush1.bf16.msra.mxu0 0
    %1834 = vmatprep.subr.bf16.mxu0 0
    %1835 = vmatpush1.bf16.msra.mxu0 0
    %1836 = vmatprep.subr.bf16.mxu0 0
    %1837 = vmatpush1.bf16.msra.mxu0 0
    %1838 = vmatprep.subr.bf16.mxu0 0
    %1839 = vmatpush1.bf16.msra.mxu0 0
    %1840 = vmatprep.subr.bf16.mxu0 0
    %1841 = vmatpush1.bf16.msra.mxu0 0
    %1842 = vmatprep.subr.bf16.mxu0 0
    %1843 = vmatpush1.bf16.msra.mxu0 %v1824
    %1844 = vmatprep.subr.bf16.mxu0 0
    %1845 = vmatpush1.bf16.msra.mxu0 %v1823
    %1846 = vmatprep.subr.bf16.mxu0 0
    %1847 = vmatpush2.bf16.msra.mxu0 0
    %1848 = vmatprep.subr.bf16.mxu0 0
    %1849 = vmatpush2.bf16.msra.mxu0 0
    %1850 = vmatprep.subr.bf16.mxu0 0
    %1851 = vmatpush2.bf16.msra.mxu0 0
    %1852 = vmatprep.subr.bf16.mxu0 0
    %1853 = vmatpush2.bf16.msra.mxu0 0
    %1854 = vmatprep.subr.bf16.mxu0 0
    %1855 = vmatpush2.bf16.msra.mxu0 0
    %1856 = vmatprep.subr.bf16.mxu0 0
    %1857 = vmatpush2.bf16.msra.mxu0 0
    %1858 = vmatprep.subr.bf16.mxu0 0
    %1859 = vmatpush2.bf16.msra.mxu0 0
    %1860 = vmatprep.subr.bf16.mxu0 0
    %1861 = vmatpush2.bf16.msra.mxu0 0
    %1862 = vmatprep.mubr.bf16.mxu0 0
    %1863 = vmatmul.mubr.bf16.gmra.mxu0 %v1828
    %v1864 = vpop.f32.mrf.mxu0
    %v1865 = vadd.f32 %v1814, %v1864
    %v1866 = vpop.f32.mrf.mxu0
    %v1867 = vpop.f32.mrf.mxu0
    %v1868 = vpop.f32.mrf.mxu0
    %1869 = vdwg.mxu0
    %v1870 = vadd.f32 %v1065, %v1865
    %v1871 = vsel %vm58, %v1870, 0.0
    %1872 = vadd.xlane.f32.xlu0 %v1871
    %v1873 = vpop.xlane.xlu0 %1872
    %v1874 = vmul.f32 %v1873, %v847
    %v1875 = vsub.f32 %v1870, %v1874
    %v1876 = vmul.f32 %v1875, %v1875
    %v1877 = vsel %vm58, %v1876, 0.0
    %1878 = vadd.xlane.f32.xlu0 %v1877
    %v1879 = vpop.xlane.xlu0 %1878
    %v1880 = vmul.f32 %v1879, %v847
    %v1881 = vadd.f32 %v1880, 1e-05
    %v1882 = vrsqrt.pop %v1881
    %v1883 = vmul.f32 %v1875, %v1882
    %v1884 = vlaneseq
    %v1885 = vshrl.u32 %v1884, 7
    %v1886 = vsub.s32 2, %v1885
    %v1887 = vrot.slane %v29, %v1886
    %v1888 = vmul.f32 %v1883, %v1887
    %v1889 = vlaneseq
    %v1890 = vshrl.u32 %v1889, 7
    %v1891 = vsub.s32 3, %v1890
    %v1892 = vrot.slane %v29, %v1891
    %v1893 = vadd.f32 %v1888, %v1892
    %v1894 = vpack.c.bf16 %v1893, %v1893
    %s1895 = scalar_lea.vmem %s3, 16
    %v1896 = vld [vmem:[%s1895] sm:$0xf]
    %v1897 = vld [vmem:[%s1895 + $0x4] sm:$0xf]
    %v1898 = vld [vmem:[%s1895 + $0x8] sm:$0xf]
    %v1899 = vld [vmem:[%s1895 + $0xc] sm:$0xf]
    %v1900 = vlaneseq
    %v1901 = vshrl.u32 %v1900, 7
    %v1902 = vsub.s32 4, %v1901
    %v1903 = vrot.slane %v29, %v1902
    %v1908 = vunpack.c.l.b16 %v1896
    %v1909 = vunpack.c.l.b16 %v1897
    %v1910 = vunpack.c.l.b16 %v1898
    %v1911 = vunpack.c.l.b16 %v1899
    %v1912 = vpack.c.b16 %v1909, %v1908
    %v1913 = vpack.c.b16 %v1911, %v1910
    %v1917 = vsel %vm58, %v1894, 0
    %1919 = vmatprep.subr.bf16.mxu0 0
    %1920 = vmatpush1.bf16.msra.mxu0 0
    %1921 = vmatprep.subr.bf16.mxu0 0
    %1922 = vmatpush1.bf16.msra.mxu0 0
    %1923 = vmatprep.subr.bf16.mxu0 0
    %1924 = vmatpush1.bf16.msra.mxu0 0
    %1925 = vmatprep.subr.bf16.mxu0 0
    %1926 = vmatpush1.bf16.msra.mxu0 0
    %1927 = vmatprep.subr.bf16.mxu0 0
    %1928 = vmatpush1.bf16.msra.mxu0 0
    %1929 = vmatprep.subr.bf16.mxu0 0
    %1930 = vmatpush1.bf16.msra.mxu0 0
    %1931 = vmatprep.subr.bf16.mxu0 0
    %1932 = vmatpush1.bf16.msra.mxu0 %v1913
    %1933 = vmatprep.subr.bf16.mxu0 0
    %1934 = vmatpush1.bf16.msra.mxu0 %v1912
    %1935 = vmatprep.subr.bf16.mxu0 0
    %1936 = vmatpush2.bf16.msra.mxu0 0
    %1937 = vmatprep.subr.bf16.mxu0 0
    %1938 = vmatpush2.bf16.msra.mxu0 0
    %1939 = vmatprep.subr.bf16.mxu0 0
    %1940 = vmatpush2.bf16.msra.mxu0 0
    %1941 = vmatprep.subr.bf16.mxu0 0
    %1942 = vmatpush2.bf16.msra.mxu0 0
    %1943 = vmatprep.subr.bf16.mxu0 0
    %1944 = vmatpush2.bf16.msra.mxu0 0
    %1945 = vmatprep.subr.bf16.mxu0 0
    %1946 = vmatpush2.bf16.msra.mxu0 0
    %1947 = vmatprep.subr.bf16.mxu0 0
    %1948 = vmatpush2.bf16.msra.mxu0 0
    %1949 = vmatprep.subr.bf16.mxu0 0
    %1950 = vmatpush2.bf16.msra.mxu0 0
    %1951 = vmatprep.mubr.bf16.mxu0 0
    %1952 = vmatmul.mubr.bf16.gmra.mxu0 %v1917
    %v1953 = vpop.f32.mrf.mxu0
    %v1954 = vadd.f32 %v1903, %v1953
    %v1955 = vpop.f32.mrf.mxu0
    %v1956 = vpop.f32.mrf.mxu0
    %v1957 = vpop.f32.mrf.mxu0
    %1958 = vdwg.mxu0
    %v1959 = vmax.f32 %v1954, 0.0
    %v1960 = vpack.c.bf16 %v1959, %v1959
    %s1961 = scalar_lea.vmem %s4, 64
    %v1962 = vld [vmem:[%s1961] sm:$0xf]
    %v1963 = vld [vmem:[%s1961 + $0x4] sm:$0xf]
    %v1964 = vld [vmem:[%s1961 + $0x8] sm:$0xf]
    %v1965 = vld [vmem:[%s1961 + $0xc] sm:$0xf]
    %v1966 = vld [vmem:[%s1961 + $0x10] sm:$0xf]
    %v1967 = vld [vmem:[%s1961 + $0x14] sm:$0xf]
    %v1968 = vld [vmem:[%s1961 + $0x18] sm:$0xf]
    %v1969 = vld [vmem:[%s1961 + $0x1c] sm:$0xf]
    %v1970 = vld [vmem:[%s1961 + $0x20] sm:$0xf]
    %v1971 = vld [vmem:[%s1961 + $0x24] sm:$0xf]
    %v1972 = vld [vmem:[%s1961 + $0x28] sm:$0xf]
    %v1973 = vld [vmem:[%s1961 + $0x2c] sm:$0xf]
    %v1974 = vld [vmem:[%s1961 + $0x30] sm:$0xf]
    %v1975 = vld [vmem:[%s1961 + $0x34] sm:$0xf]
    %v1976 = vld [vmem:[%s1961 + $0x38] sm:$0xf]
    %v1977 = vld [vmem:[%s1961 + $0x3c] sm:$0xf]
    %v1978 = vlaneseq
    %v1979 = vshrl.u32 %v1978, 7
    %v1980 = vsub.s32 5, %v1979
    %v1981 = vrot.slane %v29, %v1980
    %v1998 = vunpack.c.l.b16 %v1962
    %v1999 = vunpack.c.l.b16 %v1963
    %v2000 = vunpack.c.l.b16 %v1964
    %v2001 = vunpack.c.l.b16 %v1965
    %v2002 = vunpack.c.l.b16 %v1966
    %v2003 = vunpack.c.l.b16 %v1967
    %v2004 = vunpack.c.l.b16 %v1968
    %v2005 = vunpack.c.l.b16 %v1969
    %v2006 = vunpack.c.l.b16 %v1970
    %v2007 = vunpack.c.l.b16 %v1971
    %v2008 = vunpack.c.l.b16 %v1972
    %v2009 = vunpack.c.l.b16 %v1973
    %v2010 = vunpack.c.l.b16 %v1974
    %v2011 = vunpack.c.l.b16 %v1975
    %v2012 = vunpack.c.l.b16 %v1976
    %v2013 = vunpack.c.l.b16 %v1977
    %v2014 = vpack.c.b16 %v1999, %v1998
    %v2015 = vpack.c.b16 %v2001, %v2000
    %v2016 = vpack.c.b16 %v2003, %v2002
    %v2017 = vpack.c.b16 %v2005, %v2004
    %v2018 = vpack.c.b16 %v2007, %v2006
    %v2019 = vpack.c.b16 %v2009, %v2008
    %v2020 = vpack.c.b16 %v2011, %v2010
    %v2021 = vpack.c.b16 %v2013, %v2012
    %2030 = vmatprep.subr.bf16.mxu0 0
    %2031 = vmatpush1.bf16.msra.mxu0 %v2021
    %2032 = vmatprep.subr.bf16.mxu0 0
    %2033 = vmatpush1.bf16.msra.mxu0 %v2020
    %2034 = vmatprep.subr.bf16.mxu0 0
    %2035 = vmatpush1.bf16.msra.mxu0 %v2019
    %2036 = vmatprep.subr.bf16.mxu0 0
    %2037 = vmatpush1.bf16.msra.mxu0 %v2018
    %2038 = vmatprep.subr.bf16.mxu0 0
    %2039 = vmatpush1.bf16.msra.mxu0 %v2017
    %2040 = vmatprep.subr.bf16.mxu0 0
    %2041 = vmatpush1.bf16.msra.mxu0 %v2016
    %2042 = vmatprep.subr.bf16.mxu0 0
    %2043 = vmatpush1.bf16.msra.mxu0 %v2015
    %2044 = vmatprep.subr.bf16.mxu0 0
    %2045 = vmatpush1.bf16.msra.mxu0 %v2014
    %2046 = vmatprep.subr.bf16.mxu0 0
    %2047 = vmatpush2.bf16.msra.mxu0 0
    %2048 = vmatprep.subr.bf16.mxu0 0
    %2049 = vmatpush2.bf16.msra.mxu0 0
    %2050 = vmatprep.subr.bf16.mxu0 0
    %2051 = vmatpush2.bf16.msra.mxu0 0
    %2052 = vmatprep.subr.bf16.mxu0 0
    %2053 = vmatpush2.bf16.msra.mxu0 0
    %2054 = vmatprep.subr.bf16.mxu0 0
    %2055 = vmatpush2.bf16.msra.mxu0 0
    %2056 = vmatprep.subr.bf16.mxu0 0
    %2057 = vmatpush2.bf16.msra.mxu0 0
    %2058 = vmatprep.subr.bf16.mxu0 0
    %2059 = vmatpush2.bf16.msra.mxu0 0
    %2060 = vmatprep.subr.bf16.mxu0 0
    %2061 = vmatpush2.bf16.msra.mxu0 0
    %2062 = vmatprep.mubr.bf16.mxu0 0
    %2063 = vmatmul.mubr.bf16.gmra.mxu0 %v1960
    %v2064 = vpop.f32.mrf.mxu0
    %v2065 = vadd.f32 %v1981, %v2064
    %v2066 = vpop.f32.mrf.mxu0
    %v2067 = vpop.f32.mrf.mxu0
    %v2068 = vpop.f32.mrf.mxu0
    %2069 = vdwg.mxu0
    %v2070 = vadd.f32 %v1893, %v2065
    %v2071 = vsel %vm58, %v2070, 0.0
    %2072 = vadd.xlane.f32.xlu0 %v2071
    %v2073 = vpop.xlane.xlu0 %2072
    %v2074 = vmul.f32 %v2073, %v847
    %v2075 = vsub.f32 %v2070, %v2074
    %v2076 = vmul.f32 %v2075, %v2075
    %v2077 = vsel %vm58, %v2076, 0.0
    %2078 = vadd.xlane.f32.xlu0 %v2077
    %v2079 = vpop.xlane.xlu0 %2078
    %v2080 = vmul.f32 %v2079, %v847
    %v2081 = vadd.f32 %v2080, 1e-05
    %v2082 = vrsqrt.pop %v2081
    %v2083 = vmul.f32 %v2075, %v2082
    %v2084 = vlaneseq
    %v2085 = vshrl.u32 %v2084, 7
    %v2086 = vsub.s32 6, %v2085
    %v2087 = vrot.slane %v29, %v2086
    %v2088 = vmul.f32 %v2083, %v2087
    %v2089 = vlaneseq
    %v2090 = vshrl.u32 %v2089, 7
    %v2091 = vsub.s32 7, %v2090
    %v2092 = vrot.slane %v29, %v2091
    %v2093 = vadd.f32 %v2088, %v2092
    %v2094 = vpack.c.bf16 %v2093, %v2093
    %v2095 = vld [vmem:[%s5] sm:$0xf]
    %v2096 = vld [vmem:[%s5 + $0x4] sm:$0xf]
    %v2097 = vld [vmem:[%s5 + $0x8] sm:$0xf]
    %v2098 = vld [vmem:[%s5 + $0xc] sm:$0xf]
    %v2099 = vlaneseq
    %v2100 = vshrl.u32 %v2099, 7
    %v2101 = vsub.s32 1, %v2100
    %v2102 = vrot.slane %v30, %v2101
    %v2107 = vunpack.c.l.b16 %v2095
    %v2108 = vunpack.c.l.b16 %v2096
    %v2109 = vunpack.c.l.b16 %v2097
    %v2110 = vunpack.c.l.b16 %v2098
    %v2111 = vpack.c.b16 %v2108, %v2107
    %v2112 = vpack.c.b16 %v2110, %v2109
    %v2116 = vsel %vm58, %v2094, 0
    %2118 = vmatprep.subr.bf16.mxu0 0
    %2119 = vmatpush1.bf16.msra.mxu0 0
    %2120 = vmatprep.subr.bf16.mxu0 0
    %2121 = vmatpush1.bf16.msra.mxu0 0
    %2122 = vmatprep.subr.bf16.mxu0 0
    %2123 = vmatpush1.bf16.msra.mxu0 0
    %2124 = vmatprep.subr.bf16.mxu0 0
    %2125 = vmatpush1.bf16.msra.mxu0 0
    %2126 = vmatprep.subr.bf16.mxu0 0
    %2127 = vmatpush1.bf16.msra.mxu0 0
    %2128 = vmatprep.subr.bf16.mxu0 0
    %2129 = vmatpush1.bf16.msra.mxu0 0
    %2130 = vmatprep.subr.bf16.mxu0 0
    %2131 = vmatpush1.bf16.msra.mxu0 %v2112
    %2132 = vmatprep.subr.bf16.mxu0 0
    %2133 = vmatpush1.bf16.msra.mxu0 %v2111
    %2134 = vmatprep.subr.bf16.mxu0 0
    %2135 = vmatpush2.bf16.msra.mxu0 0
    %2136 = vmatprep.subr.bf16.mxu0 0
    %2137 = vmatpush2.bf16.msra.mxu0 0
    %2138 = vmatprep.subr.bf16.mxu0 0
    %2139 = vmatpush2.bf16.msra.mxu0 0
    %2140 = vmatprep.subr.bf16.mxu0 0
    %2141 = vmatpush2.bf16.msra.mxu0 0
    %2142 = vmatprep.subr.bf16.mxu0 0
    %2143 = vmatpush2.bf16.msra.mxu0 0
    %2144 = vmatprep.subr.bf16.mxu0 0
    %2145 = vmatpush2.bf16.msra.mxu0 0
    %2146 = vmatprep.subr.bf16.mxu0 0
    %2147 = vmatpush2.bf16.msra.mxu0 0
    %2148 = vmatprep.subr.bf16.mxu0 0
    %2149 = vmatpush2.bf16.msra.mxu0 0
    %2150 = vmatprep.mubr.bf16.mxu0 0
    %2151 = vmatmul.mubr.bf16.gmra.mxu0 %v2116
    %v2152 = vpop.f32.mrf.mxu0
    %v2153 = vadd.f32 %v2102, %v2152
    %v2154 = vpop.f32.mrf.mxu0
    %v2155 = vpop.f32.mrf.mxu0
    %v2156 = vpop.f32.mrf.mxu0
    %2157 = vdwg.mxu0
    %2158 = vst.msk [vmem:[#allocation2] sm:$0xff] %vm775, %v2153
    // Predicated region
    $region30: #{transformer_block_forward.1} parent=1 // pred_check
      _
    $region31: #{transformer_block_forward.1} parent=1 // pred_check_branch
      %2160 = sbr.rel (0) target = $region33
    $region32: #{transformer_block_forward.1} parent=1 // pred_region
      %s2162 = ssub.s32 128, 128
      %2163 = vsyncadd [#allocation3], %s2162
      %s2165 = sshll.u32 [#allocation2], 4
      %s2166 = int_to_ptr.vmem [resolvable:$true] %s2165
      %2168 = dma.vmem_to_hbm [thread:$0]  %s2166, 128, %s7, [#allocation3]
    $region33: #{transformer_block_forward.1} parent=1 // pred_fallthru
      _
    // Predicated region
    $region34: #{transformer_block_forward.1} parent=1 // pred_check
      _
    $region35: #{transformer_block_forward.1} parent=1 // pred_check_branch
      %2170 = sbr.rel (0) target = $region37
    $region36: #{transformer_block_forward.1} parent=1 // pred_region
      %2171 = dma.done [#allocation3], 128
    $region37: #{transformer_block_forward.1} parent=1 // pred_fallthru
      _
    %2172 = vsyncpa [#allocation3], 1

</llo_original>
